<compile_context>
chip_gen: v5e
topology: v5e:2x2
jax: 0.10.0
libtpu: 0.0.40
codegen_flags: <defaults>
</compile_context>

<pallas_src>
import math

import jax
import jax.numpy as jnp
from jax import lax
from jax.experimental import pallas as pl
from jax.experimental.pallas import tpu as pltpu

ASV_DIM = 3

# ---------------- model hyper-parameters (small, synthetic) ----------------
B = 2          # batch
C_IN = 3       # image channels
H = W = 16     # spatial
K = 3          # conv kernel
C_OUT = 8      # backbone feature dim (after global avg pool)
HIDDEN = 32    # n_hidden_layers = [32]
LATENT = 4     # latent_dim
NUM_MODES = 8  # num_modes
FLOW_LEN = 8   # n_density
HWP = H * W                    # 256 -> pooling slices are lane-group aligned
BHW = B * H * W                # 512 -> conv matmul lane axis (4x128 / 2x256 full)
BC = B * NUM_MODES             # 16 flattened (batch, mode) columns
LOG_2PI = math.log(2.0 * math.pi)

# ----------- dynamic pack (per-call data), lane-dense (rows, 512) -----------
PATCH_ROWS = C_IN * K * K + 1  # 28: im2col rows + ones row (folds conv bias)
PACK_CONV = 0                  # rows 0:28  -> [patches^T ; ones]
PACK_ASV = 32                  # rows 32:35 -> asv^T at cols 0:B  (8-aligned)
PACK_ROWS = 40

# --------------- static parameter atlas, (128, 128) fp32 -------------------
# All blocks start on a multiple-of-8 row; vectors live in lane column 0.
ATLAS_COLS = 128
R_WC = 0                       # rows 0:8   (C_OUT, 28)  conv weight^T | bias^T
R_WFEAT = 8                    # rows 8:12  (LATENT, C_OUT)  (W1f@W2)^T
R_WASV = 16                    # rows 16:20 (LATENT, ASV_DIM) (W1a@W2)^T
R_BHEAD = 24                   # rows 24:28 (LATENT, 1)   (b1@W2+b2)^T
R_GAMMA = 32                   # rows 32:36 (LATENT, 1)   BN gamma^T
R_BETA = 40                    # rows 40:44 (LATENT, 1)   BN beta^T
R_E = 48                       # rows 48:48+B  (B, 128) 0/1 mode-expansion matrix
R_N = 56                       # row 56     (1, 128) N[c] tiled over batch, 0 pad
R_FLOW = 64                    # layer l at rows R_FLOW+8l .. +5: [z0(4); a; b]
ATLAS_ROWS = R_FLOW + 8 * FLOW_LEN   # 128


def _softplus(x):
    # numerically safe softplus from primitive ops (used in glue / reference)
    return jnp.maximum(x, 0.0) + jnp.log(1.0 + jnp.exp(-jnp.abs(x)))


# ------------------------------ Pallas kernel ------------------------------
def post_covernet_kernel(pack_ref, atlas_ref, alpha_ref):
    # ---- backbone: conv-as-matmul, single bf16 MXU pass (bias via ones row) ----
    wc_aug = atlas_ref[R_WC:R_WC + C_OUT, 0:PATCH_ROWS].astype(jnp.bfloat16)
    patches = pack_ref[PACK_CONV:PACK_CONV + PATCH_ROWS, :].astype(jnp.bfloat16)
    convT = jnp.maximum(
        jnp.dot(wc_aug, patches, preferred_element_type=jnp.float32), 0.0)  # (C_OUT, 512)

    # ---- global average pool: per-batch lane-group-aligned slice reductions ----
    featT = jnp.concatenate(
        [jnp.sum(convT[:, bi * HWP:(bi + 1) * HWP], axis=1, keepdims=True)
         for bi in range(B)], axis=1) * (1.0 / HWP)                          # (C_OUT, B)

    # ---- folded head (no nonlinearity between the two Linears) ----
    w_featT = atlas_ref[R_WFEAT:R_WFEAT + LATENT, 0:C_OUT]                   # (LATENT, C_OUT)
    w_asvT = atlas_ref[R_WASV:R_WASV + LATENT, 0:ASV_DIM]                    # (LATENT, ASV_DIM)
    b_headT = atlas_ref[R_BHEAD:R_BHEAD + LATENT, 0:1]                       # (LATENT, 1)
    asvT = pack_ref[PACK_ASV:PACK_ASV + ASV_DIM, 0:B]                        # (ASV_DIM, B)
    logitsT = (jnp.dot(w_featT, featT, preferred_element_type=jnp.float32)
               + jnp.dot(w_asvT, asvT, preferred_element_type=jnp.float32)
               + b_headT)                                                    # (LATENT, B)

    # ---- BatchNorm1d (training mode: batch statistics over the lane axis) ----
    mu = jnp.mean(logitsT, axis=1, keepdims=True)
    var = jnp.mean((logitsT - mu) ** 2, axis=1, keepdims=True)
    gammaT = atlas_ref[R_GAMMA:R_GAMMA + LATENT, 0:1]
    betaT = atlas_ref[R_BETA:R_BETA + LATENT, 0:1]
    zkT = (logitsT - mu) * lax.rsqrt(var + 1e-5) * gammaT + betaT            # (LATENT, B)

    # ---- expand over modes with one tiny MXU matmul: (LATENT, B) @ (B, 128) ----
    expand = atlas_ref[R_E:R_E + B, :]                                       # (B, 128)
    zT = jnp.dot(zkT, expand, preferred_element_type=jnp.float32)            # (LATENT, 128)

    # ---- radial flows on LATENT separate (1, 128) lane-dense rows ----
    # column index = b*NUM_MODES + c; columns >= BC are benign padding.
    z = [zT[d:d + 1, :] for d in range(LATENT)]
    logdet = jnp.zeros((1, ATLAS_COLS), jnp.float32)
    for l in range(FLOW_LEN):                                                # static unroll
        base = R_FLOW + 8 * l
        diffs = [z[d] - atlas_ref[base + d:base + d + 1, :] for d in range(LATENT)]
        a_row = atlas_ref[base + LATENT:base + LATENT + 1, :]                # softplus(a'), 1-padded
        b_row = atlas_ref[base + LATENT + 1:base + LATENT + 2, :]            # -a + softplus(b')
        # r^2 via VPU adds (no cross-sublane reduce on the serial chain)
        r2 = diffs[0] * diffs[0]
        for dd in diffs[1:]:
            r2 = r2 + dd * dd
        r = jnp.sqrt(r2)
        h = pl.reciprocal(a_row + r, approx=True)                            # EUP slot
        bh = b_row * h
        z = [z[d] + bh * diffs[d] for d in range(LATENT)]
        op = 1.0 + bh
        det = op - b_row * h * h * r                                         # 1 + bh - b*h^2*r
        op_pow = op
        for _ in range(LATENT - 2):                                          # op^(LATENT-1)
            op_pow = op_pow * op
        logdet = logdet + jnp.log(op_pow * det)                              # merged single log

    sq = z[0] * z[0]
    for zz in z[1:]:
        sq = sq + zz * zz
    log_p = -0.5 * sq - 0.5 * LATENT * LOG_2PI                               # (1, 128)
    n_row = atlas_ref[R_N:R_N + 1, :]                                        # N[c] tiled, 0 pad
    # budget_function == 'id': alpha = 1 + N[c] * exp(log_q);  unmasked 128-lane store
    alpha_ref[...] = 1.0 + n_row * jnp.exp(log_p + logdet)


# ------------------------------ JAX glue ------------------------------
def _im2col(image):
    """NCHW image -> (B*H*W, C_in*K*K) patches (padding=1, stride=1)."""
    xp = jnp.pad(image, ((0, 0), (0, 0), (1, 1), (1, 1)))
    cols = []
    for kh in range(K):
        for kw in range(K):
            cols.append(xp[:, :, kh:kh + H, kw:kw + W])          # (B, Cin, H, W)
    p = jnp.stack(cols, axis=2)                                  # (B, Cin, K*K, H, W)
    # PyTorch weight layout (C_out, C_in, kh, kw) flattened as ci*K*K + kh*K + kw
    return p.transpose(0, 3, 4, 1, 2).reshape(B * H * W, C_IN * K * K)


def _build_dyn_pack(image, asv):
    """All per-call data in one lane-dense (PACK_ROWS, 512) operand."""
    patches_T = _im2col(image).T                                 # (27, 512)
    ones_row = jnp.ones((1, BHW), jnp.float32)
    conv_block = jnp.concatenate([patches_T, ones_row], axis=0)  # (28, 512)
    asv_rows = jnp.pad(asv.T, ((0, 0), (0, BHW - B)))            # (3, 512), asv^T in cols 0:B
    pad1 = jnp.zeros((PACK_ASV - PATCH_ROWS, BHW), jnp.float32)
    pad2 = jnp.zeros((PACK_ROWS - PACK_ASV - ASV_DIM, BHW), jnp.float32)
    return jnp.concatenate([conv_block, pad1, asv_rows, pad2], axis=0)  # (40, 512)


def build_atlas(params):
    """Coalesce all (static) parameters into one 2-D atlas.  Run ONCE, not per call."""
    assert params["N"].shape == (1, NUM_MODES), "atlas layout hard-codes NUM_MODES"
    assert params["z0"].shape == (FLOW_LEN, NUM_MODES, LATENT)
    assert BC <= ATLAS_COLS and PATCH_ROWS <= ATLAS_COLS

    # conv weight transposed, conv bias folded in as an extra column
    wc_aug = jnp.concatenate([params["wc"].T, params["bc"].T], axis=1)       # (C_OUT, 28)
    # fold the two head Linears (no nonlinearity between them)
    w_feat = params["w1f"] @ params["w2"]                                    # (C_OUT, LATENT)
    w_asv = params["w1a"] @ params["w2"]                                     # (ASV_DIM, LATENT)
    b_head = params["b1"] @ params["w2"] + params["b2"]                      # (1, LATENT)

    atlas = jnp.zeros((ATLAS_ROWS, ATLAS_COLS), jnp.float32)
    atlas = atlas.at[R_WC:R_WC + C_OUT, 0:PATCH_ROWS].set(wc_aug)
    atlas = atlas.at[R_WFEAT:R_WFEAT + LATENT, 0:C_OUT].set(w_feat.T)
    atlas = atlas.at[R_WASV:R_WASV + LATENT, 0:ASV_DIM].set(w_asv.T)
    atlas = atlas.at[R_BHEAD:R_BHEAD + LATENT, 0:1].set(b_head.T)
    atlas = atlas.at[R_GAMMA:R_GAMMA + LATENT, 0:1].set(params["gamma"].T)
    atlas = atlas.at[R_BETA:R_BETA + LATENT, 0:1].set(params["beta_bn"].T)

    # 0/1 mode-expansion matrix: zT[:, b*NUM_MODES + c] = zk[:, b]
    expand = jnp.zeros((B, ATLAS_COLS), jnp.float32)
    for bi in range(B):
        expand = expand.at[bi, bi * NUM_MODES:(bi + 1) * NUM_MODES].set(1.0)
    atlas = atlas.at[R_E:R_E + B, :].set(expand)

    # N tiled over batch: column b*NUM_MODES + c -> N[c]; zero in padding lanes
    atlas = atlas.at[R_N:R_N + 1, 0:BC].set(jnp.tile(params["N"], (1, B)))

    # radial-flow parameters: softplus precomputed, lane-major, tiled over batch.
    a_all = _softplus(params["alpha_p"])                                     # (L, C, 1)
    b_all = -a_all + _softplus(params["beta_p"])                             # (L, C, 1)
    for l in range(FLOW_LEN):
        base = R_FLOW + 8 * l
        atlas = atlas.at[base:base + LATENT, 0:BC].set(jnp.tile(params["z0"][l].T, (1, B)))
        # 'a' is padded with 1.0 beyond BC so 1/(a+r) stays finite in padding lanes
        a_row = jnp.ones((1, ATLAS_COLS), jnp.float32).at[:, 0:BC].set(
            jnp.tile(a_all[l].T, (1, B)))
        atlas = atlas.at[base + LATENT:base + LATENT + 1, :].set(a_row)
        atlas = atlas.at[base + LATENT + 1:base + LATENT + 2, 0:BC].set(
            jnp.tile(b_all[l].T, (1, B)))
    return atlas


@jax.jit
def post_covernet_forward(image, asv, atlas):
    pack = _build_dyn_pack(image, asv)                    # (40, 512) per-call operand
    vmem = pl.BlockSpec(memory_space=pltpu.MemorySpace.VMEM)
    alpha_row = pl.pallas_call(
        post_covernet_kernel,
        out_shape=jax.ShapeDtypeStruct((1, ATLAS_COLS), jnp.float32),
        in_specs=[vmem, vmem],
        out_specs=vmem,
    )(pack, atlas)
    return alpha_row[0, :BC].reshape(B, NUM_MODES)


# ------------------------- pure-JAX reference -------------------------
def reference_forward(image, asv, params):
    patches = _im2col(image)
    conv = jnp.maximum(patches @ params["wc"] + params["bc"], 0.0)
    feat = jnp.mean(conv.reshape(B, HWP, C_OUT), axis=1)
    h1 = feat @ params["w1f"] + asv @ params["w1a"] + params["b1"]
    logits = h1 @ params["w2"] + params["b2"]
    mu = jnp.mean(logits, axis=0, keepdims=True)
    var = jnp.mean((logits - mu) ** 2, axis=0, keepdims=True)
    zk = (logits - mu) / jnp.sqrt(var + 1e-5) * params["gamma"] + params["beta_bn"]

    z = jnp.broadcast_to(zk[:, None, :], (B, NUM_MODES, LATENT))
    logdet = jnp.zeros((B, NUM_MODES), jnp.float32)
    for l in range(FLOW_LEN):
        z0 = params["z0"][l][None]
        a = _softplus(params["alpha_p"][l])[None]
        b = -a + _softplus(params["beta_p"][l])[None]
        diff = z - z0
        r = jnp.sqrt(jnp.sum(diff * diff, axis=-1, keepdims=True))
        h = 1.0 / (a + r)
        bh = b * h
        z = z + bh * diff
        logdet = logdet + ((LATENT - 1) * jnp.log(1.0 + bh)
                           + jnp.log(1.0 + bh - b * h * h * r))[..., 0]
    log_p_z = -0.5 * jnp.sum(z * z, axis=-1) - 0.5 * LATENT * LOG_2PI
    return 1.0 + params["N"] * jnp.exp(log_p_z + logdet)


# -------------------------- deterministic params --------------------------
def init_params(key):
    ks = jax.random.split(key, 10)
    return {
        # backbone conv: (C_in*K*K, C_out) weight, (1, C_out) bias
        "wc": 0.1 * jax.random.normal(ks[0], (C_IN * K * K, C_OUT), jnp.float32),
        "bc": 0.05 * jax.random.normal(ks[1], (1, C_OUT), jnp.float32),
        # head linear 1 split into feature- and asv-columns of the concat
        "w1f": 0.1 * jax.random.normal(ks[2], (C_OUT, HIDDEN), jnp.float32),
        "w1a": 0.1 * jax.random.normal(ks[3], (ASV_DIM, HIDDEN), jnp.float32),
        "b1": 0.05 * jax.random.normal(ks[4], (1, HIDDEN), jnp.float32),
        # head linear 2
        "w2": 0.1 * jax.random.normal(ks[5], (HIDDEN, LATENT), jnp.float32),
        "b2": 0.05 * jax.random.normal(ks[6], (1, LATENT), jnp.float32),
        # BatchNorm1d (PyTorch default init)
        "gamma": jnp.ones((1, LATENT), jnp.float32),
        "beta_bn": jnp.zeros((1, LATENT), jnp.float32),
        # radial flow params, stacked over (flow_len, num_modes, ...)
        "z0": 0.5 * jax.random.normal(ks[7], (FLOW_LEN, NUM_MODES, LATENT), jnp.float32),
        "alpha_p": 0.3 * jax.random.normal(ks[8], (FLOW_LEN, NUM_MODES, 1), jnp.float32),
        "beta_p": 0.3 * jax.random.normal(ks[9], (FLOW_LEN, NUM_MODES, 1), jnp.float32),
        # certainty budget N (budget_function='id'), shape (1, num_modes)
        "N": jnp.arange(1.0, NUM_MODES + 1.0, dtype=jnp.float32).reshape(1, NUM_MODES),
    }


if __name__ == "__main__":
    key = jax.random.PRNGKey(0)
    k_img, k_asv, k_par = jax.random.split(key, 3)
    image = jax.random.normal(k_img, (B, C_IN, H, W), jnp.float32)       # NCHW
    asv = jax.random.normal(k_asv, (B, ASV_DIM), jnp.float32)
    params = init_params(k_par)

    # parameter packing hoisted out of the per-call path (built once)
    atlas = jax.block_until_ready(build_atlas(params))

    alpha = post_covernet_forward(image, asv, atlas)
    alpha = jax.block_until_ready(alpha)

    ref = reference_forward(image, asv, params)
    assert alpha.shape == (B, NUM_MODES)
    assert bool(jnp.all(jnp.isfinite(alpha)))
    assert bool(jnp.allclose(alpha, ref, rtol=2e-2, atol=2e-2)), (alpha, ref)
    print("KERNEL_OK")
</pallas_src>

<mosaic_0001>
module attributes {stable_mosaic.version = 11 : i64} {
  func.func @post_covernet_kernel(%arg0: memref<40x512xf32, #tpu.memory_space<vmem>>, %arg1: memref<128x128xf32, #tpu.memory_space<vmem>>, %arg2: memref<1x128xf32, #tpu.memory_space<vmem>>) attributes {dimension_semantics = [], scalar_prefetch = 0 : i64, scratch_operands = 0 : i64, tpu.core_type = #tpu.core_type<tc>} {
    %c0 = arith.constant 0 : index
    %c0_0 = arith.constant 0 : index
    %0 = vector.load %arg1[%c0, %c0_0] : memref<128x128xf32, #tpu.memory_space<vmem>>, vector<8x28xf32>
    %1 = arith.truncf %0 : vector<8x28xf32> to vector<8x28xbf16>
    %c0_1 = arith.constant 0 : index
    %c0_2 = arith.constant 0 : index
    %2 = vector.load %arg0[%c0_1, %c0_2] : memref<40x512xf32, #tpu.memory_space<vmem>>, vector<28x512xf32>
    %3 = arith.truncf %2 : vector<28x512xf32> to vector<28x512xbf16>
    %cst = arith.constant dense<0.000000e+00> : vector<8x512xf32>
    %4 = tpu.matmul %1, %3, %cst {dimension_numbers = #tpu.dot_dimension_numbers<[1], [0], [0], [1], [0, 0, 1, 1], [], []>} : vector<8x28xbf16>, vector<28x512xbf16>, vector<8x512xf32> -> vector<8x512xf32>
    %cst_3 = arith.constant 0.000000e+00 : f32
    %5 = vector.broadcast %cst_3 : f32 to vector<8x512xf32>
    %6 = arith.maximumf %4, %5 : vector<8x512xf32>
    %7 = vector.extract_strided_slice %6 {offsets = [0, 0], sizes = [8, 256], strides = [1, 1]} : vector<8x512xf32> to vector<8x256xf32>
    %cst_4 = arith.constant dense<0.000000e+00> : vector<8xf32>
    %8 = vector.multi_reduction <add>, %7, %cst_4 [1] : vector<8x256xf32> to vector<8xf32>
    %9 = vector.shape_cast %8 : vector<8xf32> to vector<8x1xf32>
    %10 = vector.extract_strided_slice %6 {offsets = [0, 256], sizes = [8, 256], strides = [1, 1]} : vector<8x512xf32> to vector<8x256xf32>
    %cst_5 = arith.constant dense<0.000000e+00> : vector<8xf32>
    %11 = vector.multi_reduction <add>, %10, %cst_5 [1] : vector<8x256xf32> to vector<8xf32>
    %12 = vector.shape_cast %11 : vector<8xf32> to vector<8x1xf32>
    %13 = tpu.concatenate %9, %12 in 1 : vector<8x1xf32>, vector<8x1xf32> -> vector<8x2xf32>
    %cst_6 = arith.constant 3.906250e-03 : f32
    %14 = vector.broadcast %cst_6 : f32 to vector<8x2xf32>
    %15 = arith.mulf %13, %14 : vector<8x2xf32>
    %c8 = arith.constant 8 : index
    %c0_7 = arith.constant 0 : index
    %16 = vector.load %arg1[%c8, %c0_7] : memref<128x128xf32, #tpu.memory_space<vmem>>, vector<4x8xf32>
    %c16 = arith.constant 16 : index
    %c0_8 = arith.constant 0 : index
    %17 = vector.load %arg1[%c16, %c0_8] : memref<128x128xf32, #tpu.memory_space<vmem>>, vector<4x3xf32>
    %c24 = arith.constant 24 : index
    %c0_9 = arith.constant 0 : index
    %18 = vector.load %arg1[%c24, %c0_9] : memref<128x128xf32, #tpu.memory_space<vmem>>, vector<4x1xf32>
    %c32 = arith.constant 32 : index
    %c0_10 = arith.constant 0 : index
    %19 = vector.load %arg0[%c32, %c0_10] : memref<40x512xf32, #tpu.memory_space<vmem>>, vector<3x2xf32>
    %cst_11 = arith.constant dense<0.000000e+00> : vector<4x2xf32>
    %20 = tpu.matmul %16, %15, %cst_11 {dimension_numbers = #tpu.dot_dimension_numbers<[1], [0], [0], [1], [0, 0, 1, 1], [], []>} : vector<4x8xf32>, vector<8x2xf32>, vector<4x2xf32> -> vector<4x2xf32>
    %cst_12 = arith.constant dense<0.000000e+00> : vector<4x2xf32>
    %21 = tpu.matmul %17, %19, %cst_12 {dimension_numbers = #tpu.dot_dimension_numbers<[1], [0], [0], [1], [0, 0, 1, 1], [], []>} : vector<4x3xf32>, vector<3x2xf32>, vector<4x2xf32> -> vector<4x2xf32>
    %22 = arith.addf %20, %21 : vector<4x2xf32>
    %23 = vector.broadcast %18 : vector<4x1xf32> to vector<4x2xf32>
    %24 = arith.addf %22, %23 : vector<4x2xf32>
    %cst_13 = arith.constant dense<0.000000e+00> : vector<4xf32>
    %25 = vector.multi_reduction <add>, %24, %cst_13 [1] : vector<4x2xf32> to vector<4xf32>
    %26 = vector.shape_cast %25 : vector<4xf32> to vector<4x1xf32>
    %cst_14 = arith.constant 2.000000e+00 : f32
    %27 = vector.broadcast %cst_14 : f32 to vector<4x1xf32>
    %28 = arith.divf %26, %27 : vector<4x1xf32>
    %29 = vector.broadcast %28 : vector<4x1xf32> to vector<4x2xf32>
    %30 = arith.subf %24, %29 : vector<4x2xf32>
    %31 = arith.mulf %30, %30 : vector<4x2xf32>
    %cst_15 = arith.constant dense<0.000000e+00> : vector<4xf32>
    %32 = vector.multi_reduction <add>, %31, %cst_15 [1] : vector<4x2xf32> to vector<4xf32>
    %33 = vector.shape_cast %32 : vector<4xf32> to vector<4x1xf32>
    %cst_16 = arith.constant 2.000000e+00 : f32
    %34 = vector.broadcast %cst_16 : f32 to vector<4x1xf32>
    %35 = arith.divf %33, %34 : vector<4x1xf32>
    %c32_17 = arith.constant 32 : index
    %c0_18 = arith.constant 0 : index
    %36 = vector.load %arg1[%c32_17, %c0_18] : memref<128x128xf32, #tpu.memory_space<vmem>>, vector<4x1xf32>
    %c40 = arith.constant 40 : index
    %c0_19 = arith.constant 0 : index
    %37 = vector.load %arg1[%c40, %c0_19] : memref<128x128xf32, #tpu.memory_space<vmem>>, vector<4x1xf32>
    %38 = vector.broadcast %28 : vector<4x1xf32> to vector<4x2xf32>
    %39 = arith.subf %24, %38 : vector<4x2xf32>
    %cst_20 = arith.constant 9.99999974E-6 : f32
    %40 = vector.broadcast %cst_20 : f32 to vector<4x1xf32>
    %41 = arith.addf %35, %40 : vector<4x1xf32>
    %42 = math.rsqrt %41 : vector<4x1xf32>
    %43 = vector.broadcast %42 : vector<4x1xf32> to vector<4x2xf32>
    %44 = arith.mulf %39, %43 : vector<4x2xf32>
    %45 = vector.broadcast %36 : vector<4x1xf32> to vector<4x2xf32>
    %46 = arith.mulf %44, %45 : vector<4x2xf32>
    %47 = vector.broadcast %37 : vector<4x1xf32> to vector<4x2xf32>
    %48 = arith.addf %46, %47 : vector<4x2xf32>
    %c48 = arith.constant 48 : index
    %c0_21 = arith.constant 0 : index
    %49 = vector.load %arg1[%c48, %c0_21] : memref<128x128xf32, #tpu.memory_space<vmem>>, vector<2x128xf32>
    %cst_22 = arith.constant dense<0.000000e+00> : vector<4x128xf32>
    %50 = tpu.matmul %48, %49, %cst_22 {dimension_numbers = #tpu.dot_dimension_numbers<[1], [0], [0], [1], [0, 0, 1, 1], [], []>} : vector<4x2xf32>, vector<2x128xf32>, vector<4x128xf32> -> vector<4x128xf32>
    %51 = vector.extract_strided_slice %50 {offsets = [0, 0], sizes = [1, 128], strides = [1, 1]} : vector<4x128xf32> to vector<1x128xf32>
    %52 = vector.extract_strided_slice %50 {offsets = [1, 0], sizes = [1, 128], strides = [1, 1]} : vector<4x128xf32> to vector<1x128xf32>
    %53 = vector.extract_strided_slice %50 {offsets = [2, 0], sizes = [1, 128], strides = [1, 1]} : vector<4x128xf32> to vector<1x128xf32>
    %54 = vector.extract_strided_slice %50 {offsets = [3, 0], sizes = [1, 128], strides = [1, 1]} : vector<4x128xf32> to vector<1x128xf32>
    %cst_23 = arith.constant 0.000000e+00 : f32
    %55 = vector.broadcast %cst_23 : f32 to vector<1x128xf32>
    %c64 = arith.constant 64 : index
    %c0_24 = arith.constant 0 : index
    %56 = vector.load %arg1[%c64, %c0_24] : memref<128x128xf32, #tpu.memory_space<vmem>>, vector<1x128xf32>
    %57 = arith.subf %51, %56 : vector<1x128xf32>
    %c65 = arith.constant 65 : index
    %c0_25 = arith.constant 0 : index
    %58 = vector.load %arg1[%c65, %c0_25] : memref<128x128xf32, #tpu.memory_space<vmem>>, vector<1x128xf32>
    %59 = arith.subf %52, %58 : vector<1x128xf32>
    %c66 = arith.constant 66 : index
    %c0_26 = arith.constant 0 : index
    %60 = vector.load %arg1[%c66, %c0_26] : memref<128x128xf32, #tpu.memory_space<vmem>>, vector<1x128xf32>
    %61 = arith.subf %53, %60 : vector<1x128xf32>
    %c67 = arith.constant 67 : index
    %c0_27 = arith.constant 0 : index
    %62 = vector.load %arg1[%c67, %c0_27] : memref<128x128xf32, #tpu.memory_space<vmem>>, vector<1x128xf32>
    %63 = arith.subf %54, %62 : vector<1x128xf32>
    %c68 = arith.constant 68 : index
    %c0_28 = arith.constant 0 : index
    %64 = vector.load %arg1[%c68, %c0_28] : memref<128x128xf32, #tpu.memory_space<vmem>>, vector<1x128xf32>
    %c69 = arith.constant 69 : index
    %c0_29 = arith.constant 0 : index
    %65 = vector.load %arg1[%c69, %c0_29] : memref<128x128xf32, #tpu.memory_space<vmem>>, vector<1x128xf32>
    %66 = arith.mulf %57, %57 : vector<1x128xf32>
    %67 = arith.mulf %59, %59 : vector<1x128xf32>
    %68 = arith.addf %66, %67 : vector<1x128xf32>
    %69 = arith.mulf %61, %61 : vector<1x128xf32>
    %70 = arith.addf %68, %69 : vector<1x128xf32>
    %71 = arith.mulf %63, %63 : vector<1x128xf32>
    %72 = arith.addf %70, %71 : vector<1x128xf32>
    %73 = math.sqrt %72 : vector<1x128xf32>
    %74 = arith.addf %64, %73 : vector<1x128xf32>
    %75 = tpu.reciprocal %74 {approx = true} : vector<1x128xf32> -> vector<1x128xf32>
    %76 = arith.mulf %65, %75 : vector<1x128xf32>
    %77 = arith.mulf %76, %57 : vector<1x128xf32>
    %78 = arith.addf %51, %77 : vector<1x128xf32>
    %79 = arith.mulf %76, %59 : vector<1x128xf32>
    %80 = arith.addf %52, %79 : vector<1x128xf32>
    %81 = arith.mulf %76, %61 : vector<1x128xf32>
    %82 = arith.addf %53, %81 : vector<1x128xf32>
    %83 = arith.mulf %76, %63 : vector<1x128xf32>
    %84 = arith.addf %54, %83 : vector<1x128xf32>
    %cst_30 = arith.constant 1.000000e+00 : f32
    %85 = vector.broadcast %cst_30 : f32 to vector<1x128xf32>
    %86 = arith.addf %85, %76 : vector<1x128xf32>
    %87 = arith.mulf %65, %75 : vector<1x128xf32>
    %88 = arith.mulf %87, %75 : vector<1x128xf32>
    %89 = arith.mulf %88, %73 : vector<1x128xf32>
    %90 = arith.subf %86, %89 : vector<1x128xf32>
    %91 = arith.mulf %86, %86 : vector<1x128xf32>
    %92 = arith.mulf %91, %86 : vector<1x128xf32>
    %93 = arith.mulf %92, %90 : vector<1x128xf32>
    %94 = math.log %93 : vector<1x128xf32>
    %95 = arith.addf %55, %94 : vector<1x128xf32>
    %c72 = arith.constant 72 : index
    %c0_31 = arith.constant 0 : index
    %96 = vector.load %arg1[%c72, %c0_31] : memref<128x128xf32, #tpu.memory_space<vmem>>, vector<1x128xf32>
    %97 = arith.subf %78, %96 : vector<1x128xf32>
    %c73 = arith.constant 73 : index
    %c0_32 = arith.constant 0 : index
    %98 = vector.load %arg1[%c73, %c0_32] : memref<128x128xf32, #tpu.memory_space<vmem>>, vector<1x128xf32>
    %99 = arith.subf %80, %98 : vector<1x128xf32>
    %c74 = arith.constant 74 : index
    %c0_33 = arith.constant 0 : index
    %100 = vector.load %arg1[%c74, %c0_33] : memref<128x128xf32, #tpu.memory_space<vmem>>, vector<1x128xf32>
    %101 = arith.subf %82, %100 : vector<1x128xf32>
    %c75 = arith.constant 75 : index
    %c0_34 = arith.constant 0 : index
    %102 = vector.load %arg1[%c75, %c0_34] : memref<128x128xf32, #tpu.memory_space<vmem>>, vector<1x128xf32>
    %103 = arith.subf %84, %102 : vector<1x128xf32>
    %c76 = arith.constant 76 : index
    %c0_35 = arith.constant 0 : index
    %104 = vector.load %arg1[%c76, %c0_35] : memref<128x128xf32, #tpu.memory_space<vmem>>, vector<1x128xf32>
    %c77 = arith.constant 77 : index
    %c0_36 = arith.constant 0 : index
    %105 = vector.load %arg1[%c77, %c0_36] : memref<128x128xf32, #tpu.memory_space<vmem>>, vector<1x128xf32>
    %106 = arith.mulf %97, %97 : vector<1x128xf32>
    %107 = arith.mulf %99, %99 : vector<1x128xf32>
    %108 = arith.addf %106, %107 : vector<1x128xf32>
    %109 = arith.mulf %101, %101 : vector<1x128xf32>
    %110 = arith.addf %108, %109 : vector<1x128xf32>
    %111 = arith.mulf %103, %103 : vector<1x128xf32>
    %112 = arith.addf %110, %111 : vector<1x128xf32>
    %113 = math.sqrt %112 : vector<1x128xf32>
    %114 = arith.addf %104, %113 : vector<1x128xf32>
    %115 = tpu.reciprocal %114 {approx = true} : vector<1x128xf32> -> vector<1x128xf32>
    %116 = arith.mulf %105, %115 : vector<1x128xf32>
    %117 = arith.mulf %116, %97 : vector<1x128xf32>
    %118 = arith.addf %78, %117 : vector<1x128xf32>
    %119 = arith.mulf %116, %99 : vector<1x128xf32>
    %120 = arith.addf %80, %119 : vector<1x128xf32>
    %121 = arith.mulf %116, %101 : vector<1x128xf32>
    %122 = arith.addf %82, %121 : vector<1x128xf32>
    %123 = arith.mulf %116, %103 : vector<1x128xf32>
    %124 = arith.addf %84, %123 : vector<1x128xf32>
    %cst_37 = arith.constant 1.000000e+00 : f32
    %125 = vector.broadcast %cst_37 : f32 to vector<1x128xf32>
    %126 = arith.addf %125, %116 : vector<1x128xf32>
    %127 = arith.mulf %105, %115 : vector<1x128xf32>
    %128 = arith.mulf %127, %115 : vector<1x128xf32>
    %129 = arith.mulf %128, %113 : vector<1x128xf32>
    %130 = arith.subf %126, %129 : vector<1x128xf32>
    %131 = arith.mulf %126, %126 : vector<1x128xf32>
    %132 = arith.mulf %131, %126 : vector<1x128xf32>
    %133 = arith.mulf %132, %130 : vector<1x128xf32>
    %134 = math.log %133 : vector<1x128xf32>
    %135 = arith.addf %95, %134 : vector<1x128xf32>
    %c80 = arith.constant 80 : index
    %c0_38 = arith.constant 0 : index
    %136 = vector.load %arg1[%c80, %c0_38] : memref<128x128xf32, #tpu.memory_space<vmem>>, vector<1x128xf32>
    %137 = arith.subf %118, %136 : vector<1x128xf32>
    %c81 = arith.constant 81 : index
    %c0_39 = arith.constant 0 : index
    %138 = vector.load %arg1[%c81, %c0_39] : memref<128x128xf32, #tpu.memory_space<vmem>>, vector<1x128xf32>
    %139 = arith.subf %120, %138 : vector<1x128xf32>
    %c82 = arith.constant 82 : index
    %c0_40 = arith.constant 0 : index
    %140 = vector.load %arg1[%c82, %c0_40] : memref<128x128xf32, #tpu.memory_space<vmem>>, vector<1x128xf32>
    %141 = arith.subf %122, %140 : vector<1x128xf32>
    %c83 = arith.constant 83 : index
    %c0_41 = arith.constant 0 : index
    %142 = vector.load %arg1[%c83, %c0_41] : memref<128x128xf32, #tpu.memory_space<vmem>>, vector<1x128xf32>
    %143 = arith.subf %124, %142 : vector<1x128xf32>
    %c84 = arith.constant 84 : index
    %c0_42 = arith.constant 0 : index
    %144 = vector.load %arg1[%c84, %c0_42] : memref<128x128xf32, #tpu.memory_space<vmem>>, vector<1x128xf32>
    %c85 = arith.constant 85 : index
    %c0_43 = arith.constant 0 : index
    %145 = vector.load %arg1[%c85, %c0_43] : memref<128x128xf32, #tpu.memory_space<vmem>>, vector<1x128xf32>
    %146 = arith.mulf %137, %137 : vector<1x128xf32>
    %147 = arith.mulf %139, %139 : vector<1x128xf32>
    %148 = arith.addf %146, %147 : vector<1x128xf32>
    %149 = arith.mulf %141, %141 : vector<1x128xf32>
    %150 = arith.addf %148, %149 : vector<1x128xf32>
    %151 = arith.mulf %143, %143 : vector<1x128xf32>
    %152 = arith.addf %150, %151 : vector<1x128xf32>
    %153 = math.sqrt %152 : vector<1x128xf32>
    %154 = arith.addf %144, %153 : vector<1x128xf32>
    %155 = tpu.reciprocal %154 {approx = true} : vector<1x128xf32> -> vector<1x128xf32>
    %156 = arith.mulf %145, %155 : vector<1x128xf32>
    %157 = arith.mulf %156, %137 : vector<1x128xf32>
    %158 = arith.addf %118, %157 : vector<1x128xf32>
    %159 = arith.mulf %156, %139 : vector<1x128xf32>
    %160 = arith.addf %120, %159 : vector<1x128xf32>
    %161 = arith.mulf %156, %141 : vector<1x128xf32>
    %162 = arith.addf %122, %161 : vector<1x128xf32>
    %163 = arith.mulf %156, %143 : vector<1x128xf32>
    %164 = arith.addf %124, %163 : vector<1x128xf32>
    %cst_44 = arith.constant 1.000000e+00 : f32
    %165 = vector.broadcast %cst_44 : f32 to vector<1x128xf32>
    %166 = arith.addf %165, %156 : vector<1x128xf32>
    %167 = arith.mulf %145, %155 : vector<1x128xf32>
    %168 = arith.mulf %167, %155 : vector<1x128xf32>
    %169 = arith.mulf %168, %153 : vector<1x128xf32>
    %170 = arith.subf %166, %169 : vector<1x128xf32>
    %171 = arith.mulf %166, %166 : vector<1x128xf32>
    %172 = arith.mulf %171, %166 : vector<1x128xf32>
    %173 = arith.mulf %172, %170 : vector<1x128xf32>
    %174 = math.log %173 : vector<1x128xf32>
    %175 = arith.addf %135, %174 : vector<1x128xf32>
    %c88 = arith.constant 88 : index
    %c0_45 = arith.constant 0 : index
    %176 = vector.load %arg1[%c88, %c0_45] : memref<128x128xf32, #tpu.memory_space<vmem>>, vector<1x128xf32>
    %177 = arith.subf %158, %176 : vector<1x128xf32>
    %c89 = arith.constant 89 : index
    %c0_46 = arith.constant 0 : index
    %178 = vector.load %arg1[%c89, %c0_46] : memref<128x128xf32, #tpu.memory_space<vmem>>, vector<1x128xf32>
    %179 = arith.subf %160, %178 : vector<1x128xf32>
    %c90 = arith.constant 90 : index
    %c0_47 = arith.constant 0 : index
    %180 = vector.load %arg1[%c90, %c0_47] : memref<128x128xf32, #tpu.memory_space<vmem>>, vector<1x128xf32>
    %181 = arith.subf %162, %180 : vector<1x128xf32>
    %c91 = arith.constant 91 : index
    %c0_48 = arith.constant 0 : index
    %182 = vector.load %arg1[%c91, %c0_48] : memref<128x128xf32, #tpu.memory_space<vmem>>, vector<1x128xf32>
    %183 = arith.subf %164, %182 : vector<1x128xf32>
    %c92 = arith.constant 92 : index
    %c0_49 = arith.constant 0 : index
    %184 = vector.load %arg1[%c92, %c0_49] : memref<128x128xf32, #tpu.memory_space<vmem>>, vector<1x128xf32>
    %c93 = arith.constant 93 : index
    %c0_50 = arith.constant 0 : index
    %185 = vector.load %arg1[%c93, %c0_50] : memref<128x128xf32, #tpu.memory_space<vmem>>, vector<1x128xf32>
    %186 = arith.mulf %177, %177 : vector<1x128xf32>
    %187 = arith.mulf %179, %179 : vector<1x128xf32>
    %188 = arith.addf %186, %187 : vector<1x128xf32>
    %189 = arith.mulf %181, %181 : vector<1x128xf32>
    %190 = arith.addf %188, %189 : vector<1x128xf32>
    %191 = arith.mulf %183, %183 : vector<1x128xf32>
    %192 = arith.addf %190, %191 : vector<1x128xf32>
    %193 = math.sqrt %192 : vector<1x128xf32>
    %194 = arith.addf %184, %193 : vector<1x128xf32>
    %195 = tpu.reciprocal %194 {approx = true} : vector<1x128xf32> -> vector<1x128xf32>
    %196 = arith.mulf %185, %195 : vector<1x128xf32>
    %197 = arith.mulf %196, %177 : vector<1x128xf32>
    %198 = arith.addf %158, %197 : vector<1x128xf32>
    %199 = arith.mulf %196, %179 : vector<1x128xf32>
    %200 = arith.addf %160, %199 : vector<1x128xf32>
    %201 = arith.mulf %196, %181 : vector<1x128xf32>
    %202 = arith.addf %162, %201 : vector<1x128xf32>
    %203 = arith.mulf %196, %183 : vector<1x128xf32>
    %204 = arith.addf %164, %203 : vector<1x128xf32>
    %cst_51 = arith.constant 1.000000e+00 : f32
    %205 = vector.broadcast %cst_51 : f32 to vector<1x128xf32>
    %206 = arith.addf %205, %196 : vector<1x128xf32>
    %207 = arith.mulf %185, %195 : vector<1x128xf32>
    %208 = arith.mulf %207, %195 : vector<1x128xf32>
    %209 = arith.mulf %208, %193 : vector<1x128xf32>
    %210 = arith.subf %206, %209 : vector<1x128xf32>
    %211 = arith.mulf %206, %206 : vector<1x128xf32>
    %212 = arith.mulf %211, %206 : vector<1x128xf32>
    %213 = arith.mulf %212, %210 : vector<1x128xf32>
    %214 = math.log %213 : vector<1x128xf32>
    %215 = arith.addf %175, %214 : vector<1x128xf32>
    %c96 = arith.constant 96 : index
    %c0_52 = arith.constant 0 : index
    %216 = vector.load %arg1[%c96, %c0_52] : memref<128x128xf32, #tpu.memory_space<vmem>>, vector<1x128xf32>
    %217 = arith.subf %198, %216 : vector<1x128xf32>
    %c97 = arith.constant 97 : index
    %c0_53 = arith.constant 0 : index
    %218 = vector.load %arg1[%c97, %c0_53] : memref<128x128xf32, #tpu.memory_space<vmem>>, vector<1x128xf32>
    %219 = arith.subf %200, %218 : vector<1x128xf32>
    %c98 = arith.constant 98 : index
    %c0_54 = arith.constant 0 : index
    %220 = vector.load %arg1[%c98, %c0_54] : memref<128x128xf32, #tpu.memory_space<vmem>>, vector<1x128xf32>
    %221 = arith.subf %202, %220 : vector<1x128xf32>
    %c99 = arith.constant 99 : index
    %c0_55 = arith.constant 0 : index
    %222 = vector.load %arg1[%c99, %c0_55] : memref<128x128xf32, #tpu.memory_space<vmem>>, vector<1x128xf32>
    %223 = arith.subf %204, %222 : vector<1x128xf32>
    %c100 = arith.constant 100 : index
    %c0_56 = arith.constant 0 : index
    %224 = vector.load %arg1[%c100, %c0_56] : memref<128x128xf32, #tpu.memory_space<vmem>>, vector<1x128xf32>
    %c101 = arith.constant 101 : index
    %c0_57 = arith.constant 0 : index
    %225 = vector.load %arg1[%c101, %c0_57] : memref<128x128xf32, #tpu.memory_space<vmem>>, vector<1x128xf32>
    %226 = arith.mulf %217, %217 : vector<1x128xf32>
    %227 = arith.mulf %219, %219 : vector<1x128xf32>
    %228 = arith.addf %226, %227 : vector<1x128xf32>
    %229 = arith.mulf %221, %221 : vector<1x128xf32>
    %230 = arith.addf %228, %229 : vector<1x128xf32>
    %231 = arith.mulf %223, %223 : vector<1x128xf32>
    %232 = arith.addf %230, %231 : vector<1x128xf32>
    %233 = math.sqrt %232 : vector<1x128xf32>
    %234 = arith.addf %224, %233 : vector<1x128xf32>
    %235 = tpu.reciprocal %234 {approx = true} : vector<1x128xf32> -> vector<1x128xf32>
    %236 = arith.mulf %225, %235 : vector<1x128xf32>
    %237 = arith.mulf %236, %217 : vector<1x128xf32>
    %238 = arith.addf %198, %237 : vector<1x128xf32>
    %239 = arith.mulf %236, %219 : vector<1x128xf32>
    %240 = arith.addf %200, %239 : vector<1x128xf32>
    %241 = arith.mulf %236, %221 : vector<1x128xf32>
    %242 = arith.addf %202, %241 : vector<1x128xf32>
    %243 = arith.mulf %236, %223 : vector<1x128xf32>
    %244 = arith.addf %204, %243 : vector<1x128xf32>
    %cst_58 = arith.constant 1.000000e+00 : f32
    %245 = vector.broadcast %cst_58 : f32 to vector<1x128xf32>
    %246 = arith.addf %245, %236 : vector<1x128xf32>
    %247 = arith.mulf %225, %235 : vector<1x128xf32>
    %248 = arith.mulf %247, %235 : vector<1x128xf32>
    %249 = arith.mulf %248, %233 : vector<1x128xf32>
    %250 = arith.subf %246, %249 : vector<1x128xf32>
    %251 = arith.mulf %246, %246 : vector<1x128xf32>
    %252 = arith.mulf %251, %246 : vector<1x128xf32>
    %253 = arith.mulf %252, %250 : vector<1x128xf32>
    %254 = math.log %253 : vector<1x128xf32>
    %255 = arith.addf %215, %254 : vector<1x128xf32>
    %c104 = arith.constant 104 : index
    %c0_59 = arith.constant 0 : index
    %256 = vector.load %arg1[%c104, %c0_59] : memref<128x128xf32, #tpu.memory_space<vmem>>, vector<1x128xf32>
    %257 = arith.subf %238, %256 : vector<1x128xf32>
    %c105 = arith.constant 105 : index
    %c0_60 = arith.constant 0 : index
    %258 = vector.load %arg1[%c105, %c0_60] : memref<128x128xf32, #tpu.memory_space<vmem>>, vector<1x128xf32>
    %259 = arith.subf %240, %258 : vector<1x128xf32>
    %c106 = arith.constant 106 : index
    %c0_61 = arith.constant 0 : index
    %260 = vector.load %arg1[%c106, %c0_61] : memref<128x128xf32, #tpu.memory_space<vmem>>, vector<1x128xf32>
    %261 = arith.subf %242, %260 : vector<1x128xf32>
    %c107 = arith.constant 107 : index
    %c0_62 = arith.constant 0 : index
    %262 = vector.load %arg1[%c107, %c0_62] : memref<128x128xf32, #tpu.memory_space<vmem>>, vector<1x128xf32>
    %263 = arith.subf %244, %262 : vector<1x128xf32>
    %c108 = arith.constant 108 : index
    %c0_63 = arith.constant 0 : index
    %264 = vector.load %arg1[%c108, %c0_63] : memref<128x128xf32, #tpu.memory_space<vmem>>, vector<1x128xf32>
    %c109 = arith.constant 109 : index
    %c0_64 = arith.constant 0 : index
    %265 = vector.load %arg1[%c109, %c0_64] : memref<128x128xf32, #tpu.memory_space<vmem>>, vector<1x128xf32>
    %266 = arith.mulf %257, %257 : vector<1x128xf32>
    %267 = arith.mulf %259, %259 : vector<1x128xf32>
    %268 = arith.addf %266, %267 : vector<1x128xf32>
    %269 = arith.mulf %261, %261 : vector<1x128xf32>
    %270 = arith.addf %268, %269 : vector<1x128xf32>
    %271 = arith.mulf %263, %263 : vector<1x128xf32>
    %272 = arith.addf %270, %271 : vector<1x128xf32>
    %273 = math.sqrt %272 : vector<1x128xf32>
    %274 = arith.addf %264, %273 : vector<1x128xf32>
    %275 = tpu.reciprocal %274 {approx = true} : vector<1x128xf32> -> vector<1x128xf32>
    %276 = arith.mulf %265, %275 : vector<1x128xf32>
    %277 = arith.mulf %276, %257 : vector<1x128xf32>
    %278 = arith.addf %238, %277 : vector<1x128xf32>
    %279 = arith.mulf %276, %259 : vector<1x128xf32>
    %280 = arith.addf %240, %279 : vector<1x128xf32>
    %281 = arith.mulf %276, %261 : vector<1x128xf32>
    %282 = arith.addf %242, %281 : vector<1x128xf32>
    %283 = arith.mulf %276, %263 : vector<1x128xf32>
    %284 = arith.addf %244, %283 : vector<1x128xf32>
    %cst_65 = arith.constant 1.000000e+00 : f32
    %285 = vector.broadcast %cst_65 : f32 to vector<1x128xf32>
    %286 = arith.addf %285, %276 : vector<1x128xf32>
    %287 = arith.mulf %265, %275 : vector<1x128xf32>
    %288 = arith.mulf %287, %275 : vector<1x128xf32>
    %289 = arith.mulf %288, %273 : vector<1x128xf32>
    %290 = arith.subf %286, %289 : vector<1x128xf32>
    %291 = arith.mulf %286, %286 : vector<1x128xf32>
    %292 = arith.mulf %291, %286 : vector<1x128xf32>
    %293 = arith.mulf %292, %290 : vector<1x128xf32>
    %294 = math.log %293 : vector<1x128xf32>
    %295 = arith.addf %255, %294 : vector<1x128xf32>
    %c112 = arith.constant 112 : index
    %c0_66 = arith.constant 0 : index
    %296 = vector.load %arg1[%c112, %c0_66] : memref<128x128xf32, #tpu.memory_space<vmem>>, vector<1x128xf32>
    %297 = arith.subf %278, %296 : vector<1x128xf32>
    %c113 = arith.constant 113 : index
    %c0_67 = arith.constant 0 : index
    %298 = vector.load %arg1[%c113, %c0_67] : memref<128x128xf32, #tpu.memory_space<vmem>>, vector<1x128xf32>
    %299 = arith.subf %280, %298 : vector<1x128xf32>
    %c114 = arith.constant 114 : index
    %c0_68 = arith.constant 0 : index
    %300 = vector.load %arg1[%c114, %c0_68] : memref<128x128xf32, #tpu.memory_space<vmem>>, vector<1x128xf32>
    %301 = arith.subf %282, %300 : vector<1x128xf32>
    %c115 = arith.constant 115 : index
    %c0_69 = arith.constant 0 : index
    %302 = vector.load %arg1[%c115, %c0_69] : memref<128x128xf32, #tpu.memory_space<vmem>>, vector<1x128xf32>
    %303 = arith.subf %284, %302 : vector<1x128xf32>
    %c116 = arith.constant 116 : index
    %c0_70 = arith.constant 0 : index
    %304 = vector.load %arg1[%c116, %c0_70] : memref<128x128xf32, #tpu.memory_space<vmem>>, vector<1x128xf32>
    %c117 = arith.constant 117 : index
    %c0_71 = arith.constant 0 : index
    %305 = vector.load %arg1[%c117, %c0_71] : memref<128x128xf32, #tpu.memory_space<vmem>>, vector<1x128xf32>
    %306 = arith.mulf %297, %297 : vector<1x128xf32>
    %307 = arith.mulf %299, %299 : vector<1x128xf32>
    %308 = arith.addf %306, %307 : vector<1x128xf32>
    %309 = arith.mulf %301, %301 : vector<1x128xf32>
    %310 = arith.addf %308, %309 : vector<1x128xf32>
    %311 = arith.mulf %303, %303 : vector<1x128xf32>
    %312 = arith.addf %310, %311 : vector<1x128xf32>
    %313 = math.sqrt %312 : vector<1x128xf32>
    %314 = arith.addf %304, %313 : vector<1x128xf32>
    %315 = tpu.reciprocal %314 {approx = true} : vector<1x128xf32> -> vector<1x128xf32>
    %316 = arith.mulf %305, %315 : vector<1x128xf32>
    %317 = arith.mulf %316, %297 : vector<1x128xf32>
    %318 = arith.addf %278, %317 : vector<1x128xf32>
    %319 = arith.mulf %316, %299 : vector<1x128xf32>
    %320 = arith.addf %280, %319 : vector<1x128xf32>
    %321 = arith.mulf %316, %301 : vector<1x128xf32>
    %322 = arith.addf %282, %321 : vector<1x128xf32>
    %323 = arith.mulf %316, %303 : vector<1x128xf32>
    %324 = arith.addf %284, %323 : vector<1x128xf32>
    %cst_72 = arith.constant 1.000000e+00 : f32
    %325 = vector.broadcast %cst_72 : f32 to vector<1x128xf32>
    %326 = arith.addf %325, %316 : vector<1x128xf32>
    %327 = arith.mulf %305, %315 : vector<1x128xf32>
    %328 = arith.mulf %327, %315 : vector<1x128xf32>
    %329 = arith.mulf %328, %313 : vector<1x128xf32>
    %330 = arith.subf %326, %329 : vector<1x128xf32>
    %331 = arith.mulf %326, %326 : vector<1x128xf32>
    %332 = arith.mulf %331, %326 : vector<1x128xf32>
    %333 = arith.mulf %332, %330 : vector<1x128xf32>
    %334 = math.log %333 : vector<1x128xf32>
    %335 = arith.addf %295, %334 : vector<1x128xf32>
    %c120 = arith.constant 120 : index
    %c0_73 = arith.constant 0 : index
    %336 = vector.load %arg1[%c120, %c0_73] : memref<128x128xf32, #tpu.memory_space<vmem>>, vector<1x128xf32>
    %337 = arith.subf %318, %336 : vector<1x128xf32>
    %c121 = arith.constant 121 : index
    %c0_74 = arith.constant 0 : index
    %338 = vector.load %arg1[%c121, %c0_74] : memref<128x128xf32, #tpu.memory_space<vmem>>, vector<1x128xf32>
    %339 = arith.subf %320, %338 : vector<1x128xf32>
    %c122 = arith.constant 122 : index
    %c0_75 = arith.constant 0 : index
    %340 = vector.load %arg1[%c122, %c0_75] : memref<128x128xf32, #tpu.memory_space<vmem>>, vector<1x128xf32>
    %341 = arith.subf %322, %340 : vector<1x128xf32>
    %c123 = arith.constant 123 : index
    %c0_76 = arith.constant 0 : index
    %342 = vector.load %arg1[%c123, %c0_76] : memref<128x128xf32, #tpu.memory_space<vmem>>, vector<1x128xf32>
    %343 = arith.subf %324, %342 : vector<1x128xf32>
    %c124 = arith.constant 124 : index
    %c0_77 = arith.constant 0 : index
    %344 = vector.load %arg1[%c124, %c0_77] : memref<128x128xf32, #tpu.memory_space<vmem>>, vector<1x128xf32>
    %c125 = arith.constant 125 : index
    %c0_78 = arith.constant 0 : index
    %345 = vector.load %arg1[%c125, %c0_78] : memref<128x128xf32, #tpu.memory_space<vmem>>, vector<1x128xf32>
    %346 = arith.mulf %337, %337 : vector<1x128xf32>
    %347 = arith.mulf %339, %339 : vector<1x128xf32>
    %348 = arith.addf %346, %347 : vector<1x128xf32>
    %349 = arith.mulf %341, %341 : vector<1x128xf32>
    %350 = arith.addf %348, %349 : vector<1x128xf32>
    %351 = arith.mulf %343, %343 : vector<1x128xf32>
    %352 = arith.addf %350, %351 : vector<1x128xf32>
    %353 = math.sqrt %352 : vector<1x128xf32>
    %354 = arith.addf %344, %353 : vector<1x128xf32>
    %355 = tpu.reciprocal %354 {approx = true} : vector<1x128xf32> -> vector<1x128xf32>
    %356 = arith.mulf %345, %355 : vector<1x128xf32>
    %357 = arith.mulf %356, %337 : vector<1x128xf32>
    %358 = arith.addf %318, %357 : vector<1x128xf32>
    %359 = arith.mulf %356, %339 : vector<1x128xf32>
    %360 = arith.addf %320, %359 : vector<1x128xf32>
    %361 = arith.mulf %356, %341 : vector<1x128xf32>
    %362 = arith.addf %322, %361 : vector<1x128xf32>
    %363 = arith.mulf %356, %343 : vector<1x128xf32>
    %364 = arith.addf %324, %363 : vector<1x128xf32>
    %cst_79 = arith.constant 1.000000e+00 : f32
    %365 = vector.broadcast %cst_79 : f32 to vector<1x128xf32>
    %366 = arith.addf %365, %356 : vector<1x128xf32>
    %367 = arith.mulf %345, %355 : vector<1x128xf32>
    %368 = arith.mulf %367, %355 : vector<1x128xf32>
    %369 = arith.mulf %368, %353 : vector<1x128xf32>
    %370 = arith.subf %366, %369 : vector<1x128xf32>
    %371 = arith.mulf %366, %366 : vector<1x128xf32>
    %372 = arith.mulf %371, %366 : vector<1x128xf32>
    %373 = arith.mulf %372, %370 : vector<1x128xf32>
    %374 = math.log %373 : vector<1x128xf32>
    %375 = arith.addf %335, %374 : vector<1x128xf32>
    %376 = arith.mulf %358, %358 : vector<1x128xf32>
    %377 = arith.mulf %360, %360 : vector<1x128xf32>
    %378 = arith.addf %376, %377 : vector<1x128xf32>
    %379 = arith.mulf %362, %362 : vector<1x128xf32>
    %380 = arith.addf %378, %379 : vector<1x128xf32>
    %381 = arith.mulf %364, %364 : vector<1x128xf32>
    %382 = arith.addf %380, %381 : vector<1x128xf32>
    %cst_80 = arith.constant -5.000000e-01 : f32
    %383 = vector.broadcast %cst_80 : f32 to vector<1x128xf32>
    %384 = arith.mulf %383, %382 : vector<1x128xf32>
    %cst_81 = arith.constant 3.67575407 : f32
    %385 = vector.broadcast %cst_81 : f32 to vector<1x128xf32>
    %386 = arith.subf %384, %385 : vector<1x128xf32>
    %c56 = arith.constant 56 : index
    %c0_82 = arith.constant 0 : index
    %387 = vector.load %arg1[%c56, %c0_82] : memref<128x128xf32, #tpu.memory_space<vmem>>, vector<1x128xf32>
    %388 = arith.addf %386, %375 : vector<1x128xf32>
    %389 = math.exp %388 : vector<1x128xf32>
    %390 = arith.mulf %387, %389 : vector<1x128xf32>
    %cst_83 = arith.constant 1.000000e+00 : f32
    %391 = vector.broadcast %cst_83 : f32 to vector<1x128xf32>
    %392 = arith.addf %391, %390 : vector<1x128xf32>
    %c0_84 = arith.constant 0 : index
    %c0_85 = arith.constant 0 : index
    %393 = vector.load %arg2[%c0_84, %c0_85] : memref<1x128xf32, #tpu.memory_space<vmem>>, vector<1x128xf32>
    tpu.vector_store %arg2[%c0_84, %c0_85], %392 {strides = array<i32>} : memref<1x128xf32, #tpu.memory_space<vmem>>, vector<1x128xf32>,
    return
  }
}

</mosaic_0001>

<llo_original>
// kernel: squeeze.1
$region0: #{squeeze.1}
  %s0 = inlined_call_operand.vmem [shape: f32[16], index: 0, kind: input, shape index: {}]
  %s1 = inlined_call_operand.hbm [shape: f32[2,8], index: 1, kind: output, shape index: {}]
  $region1: #{squeeze.1} parent=0
    #allocation0 [shape = 'u8[1024]{0}', space=vmem, size = 0x400, scoped, tag = 'operand span for operand 1']
    #allocation1 [shape = 's32[1]{0}', space=sflag, size = 0x4, scoped, tag = 'scoped memory for squeeze.1']
    #allocation2 [shape = 'u8[4096]{0}', space=vmem, size = 0x1000, scoped, tag = 'scoped mem for output reshape']
    #allocation3 [shape = 'u8[4096]{0}', space=vmem, size = 0x1000, scoped, tag = 'scoped mem for input reshape']
    %2 = vsyncpa [#allocation1], 0
    %s4 = ssub.s32 2, 1
    %v5 = vld [vmem:[%s0] sm:%s4]
    %6 = vst [vmem:[#allocation3] sm:%s4] %v5
    %v7 = vld [vmem:[#allocation3] sm:$0x1]
    %vm8 = vcmask 64512
    %9 = vst.msk [vmem:[#allocation2] sm:$0x1] %vm8, %v7
    %v10 = vld [vmem:[#allocation3] sm:$0x1]
    %11 = vrot.lane.b32.xlu0 %v10, 120
    %v12 = vpop.permute.xlu0 %11
    %vm13 = vcmask 64512
    %s14 = scalar_lea.vmem [#allocation2], 1
    %15 = vst.msk [vmem:[%s14] sm:$0x1] %vm13, %v12
    %s17 = ssub.s32 4, 1
    %v18 = vld [vmem:[#allocation2] sm:%s17]
    %s20 = ssub.s32 4, 1
    %21 = vst [vmem:[#allocation0] sm:%s20] %v18
    %23 = vsyncadd [#allocation1], 0
    %s25 = sshll.u32 [#allocation0], 4
    %s26 = int_to_ptr.vmem [resolvable:$true] %s25
    %s27 = sshll.u32 %s1, 4
    %s28 = int_to_ptr.hbm [resolvable:$true] %s27
    %30 = dma.vmem_to_hbm [thread:$0]  %s26, 32, %s28, [#allocation1]
    %32 = dma.done [#allocation1], 32
    %33 = vsyncpa [#allocation1], 1

// kernel: post_covernet_forward.1
$region0: #{post_covernet_forward.1}
  #allocation0 [shape = 'u32[]', space=smem, size = 0x4, offset = 0x4, fixed_abs, tag = 'smem constant byte address 0x4 - core index']
  #allocation1 [shape = 'u32[72,128]{1,0:T(1,128)}', space=vmem, size = 0x9000, scoped, tag = 'internal scratch']
  %s0 = inlined_call_operand.vmem [shape: f32[40,512], index: 0, kind: input, shape index: {}]
  %s1 = inlined_call_operand.vmem [shape: f32[128,128], index: 1, kind: input, shape index: {}]
  %s2 = inlined_call_operand.vmem [shape: f32[1,128], index: 2, kind: output, shape index: {}]
  %s3 = sld [smem:[#allocation0]]
  $region18: #{post_covernet_forward.1} parent=0
    _
  %s5 = ssub.s32 1, %s3
  %s6 = scalar_select 0, %s5, %s3
  // Predicated region
  $region2: #{post_covernet_forward.1} parent=0 // pred_check
    _
  $region3: #{post_covernet_forward.1} parent=0 // pred_check_branch
    %8 = sbr.rel (0) target = $region5
  $region4: #{post_covernet_forward.1} parent=0 // pred_region
    _
  $region5: #{post_covernet_forward.1} parent=0 // pred_fallthru
    _
  // Predicated region
  $region6: #{post_covernet_forward.1} parent=0 // pred_check
    _
  $region7: #{post_covernet_forward.1} parent=0 // pred_check_branch
    %10 = sbr.rel (0) target = $region9
  $region8: #{post_covernet_forward.1} parent=0 // pred_region
    _
  $region9: #{post_covernet_forward.1} parent=0 // pred_fallthru
    _
  %v12 = vld [vmem:[%s1] sm:$0xff]
  %v13 = vpack.c.bf16 %v12, %v12
  %v14 = vld [vmem:[%s0] sm:$0xff]
  %v15 = vld [vmem:[%s0 + $0x8] sm:$0xff]
  %v16 = vld [vmem:[%s0 + $0x10] sm:$0xff]
  %v17 = vld [vmem:[%s0 + $0x18] sm:$0xff]
  %v18 = vld [vmem:[%s0 + $0x20] sm:$0xff]
  %v19 = vld [vmem:[%s0 + $0x28] sm:$0xff]
  %v20 = vld [vmem:[%s0 + $0x30] sm:$0xff]
  %v21 = vld [vmem:[%s0 + $0x38] sm:$0xff]
  %v22 = vld [vmem:[%s0 + $0x40] sm:$0xff]
  %v23 = vld [vmem:[%s0 + $0x48] sm:$0xff]
  %v24 = vld [vmem:[%s0 + $0x50] sm:$0xff]
  %v25 = vld [vmem:[%s0 + $0x58] sm:$0xff]
  %v26 = vld [vmem:[%s0 + $0x60] sm:$0xf]
  %v27 = vld [vmem:[%s0 + $0x68] sm:$0xf]
  %v28 = vld [vmem:[%s0 + $0x70] sm:$0xf]
  %v29 = vld [vmem:[%s0 + $0x78] sm:$0xf]
  %v30 = vpack.c.bf16 %v18, %v14
  %v31 = vpack.c.bf16 %v19, %v15
  %v32 = vpack.c.bf16 %v20, %v16
  %v33 = vpack.c.bf16 %v21, %v17
  %v34 = vpack.c.bf16 %v26, %v22
  %v35 = vpack.c.bf16 %v27, %v23
  %v36 = vpack.c.bf16 %v28, %v24
  %v37 = vpack.c.bf16 %v29, %v25
  %vm38 = vcmask 228352
  %v40 = vsel %vm38, %v13, 0
  %vm42 = vcmask 1045504
  %v44 = vsel %vm42, %v34, 0
  %v47 = vsel %vm42, %v35, 0
  %v50 = vsel %vm42, %v36, 0
  %v53 = vsel %vm42, %v37, 0
  %55 = vmatpush.bf16.msra.mxu0 0
  %56 = vmatpush.bf16.msra.mxu0 0
  %57 = vmatpush.bf16.msra.mxu0 0
  %58 = vmatpush.bf16.msra.mxu0 0
  %59 = vmatpush.bf16.msra.mxu0 0
  %60 = vmatpush.bf16.msra.mxu0 0
  %61 = vmatpush.bf16.msra.mxu0 %v44
  %62 = vmatpush.bf16.msra.mxu0 %v30
  %63 = vmatmul.bf16.gmra.mxu0 %v40
  %v64 = vpop.f32.mrf.mxu0
  %v65 = vadd.f32 0.0, %v64
  %v66 = vpop.f32.mrf.mxu0
  %67 = vdwg.mxu0
  %68 = vmatpush.bf16.msra.mxu0 0
  %69 = vmatpush.bf16.msra.mxu0 0
  %70 = vmatpush.bf16.msra.mxu0 0
  %71 = vmatpush.bf16.msra.mxu0 0
  %72 = vmatpush.bf16.msra.mxu0 0
  %73 = vmatpush.bf16.msra.mxu0 0
  %74 = vmatpush.bf16.msra.mxu0 %v47
  %75 = vmatpush.bf16.msra.mxu0 %v31
  %76 = vmatmul.bf16.gmra.mxu0 %v40
  %v77 = vpop.f32.mrf.mxu0
  %v78 = vadd.f32 0.0, %v77
  %v79 = vpop.f32.mrf.mxu0
  %80 = vdwg.mxu0
  %81 = vmatpush.bf16.msra.mxu0 0
  %82 = vmatpush.bf16.msra.mxu0 0
  %83 = vmatpush.bf16.msra.mxu0 0
  %84 = vmatpush.bf16.msra.mxu0 0
  %85 = vmatpush.bf16.msra.mxu0 0
  %86 = vmatpush.bf16.msra.mxu0 0
  %87 = vmatpush.bf16.msra.mxu0 %v50
  %88 = vmatpush.bf16.msra.mxu0 %v32
  %89 = vmatmul.bf16.gmra.mxu0 %v40
  %v90 = vpop.f32.mrf.mxu0
  %v91 = vadd.f32 0.0, %v90
  %v92 = vpop.f32.mrf.mxu0
  %93 = vdwg.mxu0
  %94 = vmatpush.bf16.msra.mxu0 0
  %95 = vmatpush.bf16.msra.mxu0 0
  %96 = vmatpush.bf16.msra.mxu0 0
  %97 = vmatpush.bf16.msra.mxu0 0
  %98 = vmatpush.bf16.msra.mxu0 0
  %99 = vmatpush.bf16.msra.mxu0 0
  %100 = vmatpush.bf16.msra.mxu0 %v53
  %101 = vmatpush.bf16.msra.mxu0 %v33
  %102 = vmatmul.bf16.gmra.mxu0 %v40
  %v103 = vpop.f32.mrf.mxu0
  %v104 = vadd.f32 0.0, %v103
  %v105 = vpop.f32.mrf.mxu0
  %106 = vdwg.mxu0
  %v107 = vmax.f32 %v65, 0.0
  %v108 = vmax.f32 %v78, 0.0
  %v109 = vmax.f32 %v91, 0.0
  %v110 = vmax.f32 %v104, 0.0
  %v111 = vadd.f32 %v107, %v108
  %112 = vadd.xlane.f32.xlu0 %v111
  %v113 = vpop.xlane.xlu0 %112
  %v114 = vadd.f32 %v109, %v110
  %115 = vadd.xlane.f32.xlu0 %v114
  %v116 = vpop.xlane.xlu0 %115
  %vm117 = vcmask 7168
  %v118 = vsel %vm117, %v113, %v116
  %v119 = vmul.f32 %v118, 0.00390625
  %v120 = vld [vmem:[%s1 + $0x8] sm:$0xf]
  %v121 = vld [vmem:[%s1 + $0x10] sm:$0xf]
  %v122 = vld [vmem:[%s1 + $0x18] sm:$0xf]
  %v123 = vld [vmem:[%s0 + $0x80] sm:$0x7]
  %vm124 = vcmask 23552
  %v126 = vsel %vm124, %v121, 0
  %vm128 = vcmask 1042432
  %v130 = vsel %vm128, %v123, 0
  %132 = vmatpush.msra.mxu0 0.0
  %133 = vmatpush.msra.mxu0 0.0
  %134 = vmatpush.msra.mxu0 0.0
  %135 = vmatpush.msra.mxu0 0.0
  %136 = vmatpush.msra.mxu0 0.0
  %137 = vmatpush.msra.mxu0 0.0
  %138 = vmatpush.msra.mxu0 0.0
  %139 = vmatpush.msra.mxu0 0.0
  %140 = vmatpush.msra.mxu0 0.0
  %141 = vmatpush.msra.mxu0 0.0
  %142 = vmatpush.msra.mxu0 0.0
  %143 = vmatpush.msra.mxu0 0.0
  %144 = vmatpush.msra.mxu0 0.0
  %145 = vmatpush.msra.mxu0 0.0
  %146 = vmatpush.msra.mxu0 0.0
  %147 = vmatpush.msra.mxu0 %v130
  %148 = vmatmul.f32.gmra.mxu0 %v126
  %v149 = vpop.f32.mrf.mxu0
  %v150 = vadd.f32 0.0, %v149
  %151 = vdwg.mxu0
  %vm152 = vcmask 64512
  %v154 = vsel %vm152, %v120, 0
  %156 = vmatpush.msra.mxu0 0.0
  %157 = vmatpush.msra.mxu0 0.0
  %158 = vmatpush.msra.mxu0 0.0
  %159 = vmatpush.msra.mxu0 0.0
  %160 = vmatpush.msra.mxu0 0.0
  %161 = vmatpush.msra.mxu0 0.0
  %162 = vmatpush.msra.mxu0 0.0
  %163 = vmatpush.msra.mxu0 0.0
  %164 = vmatpush.msra.mxu0 0.0
  %165 = vmatpush.msra.mxu0 0.0
  %166 = vmatpush.msra.mxu0 0.0
  %167 = vmatpush.msra.mxu0 0.0
  %168 = vmatpush.msra.mxu0 0.0
  %169 = vmatpush.msra.mxu0 0.0
  %170 = vmatpush.msra.mxu0 0.0
  %171 = vmatpush.msra.mxu0 %v119
  %172 = vmatmul.f32.gmra.mxu0 %v154
  %v173 = vpop.f32.mrf.mxu0
  %v174 = vadd.f32 %v150, %v173
  %175 = vdwg.mxu0
  %177 = vset.pattern.permute.xlu0 0
  %178 = vperm.xlu0 %177, %v122
  %v179 = vpop.permute.xlu0 %178
  %v181 = vadd.f32 %v174, %v179
  %vm182 = vcmask 11264
  %v183 = vsel %vm182, %v181, 0.0
  %184 = vadd.xlane.f32.xlu0 %v183
  %v185 = vpop.xlane.xlu0 %184
  %v186 = vrcp.pop 2.0
  %v187 = vmul.f32 2.0, %v186
  %v188 = vsub.f32 1.0, %v187
  %v189 = vmul.f32 %v186, %v188
  %v190 = vadd.f32 %v186, %v189
  %vm191 = vweird.f32 %v186
  %v192 = vsel %vm191, %v186, %v190
  %v193 = vmul.f32 %v185, %v192
  %v194 = vsub.f32 %v181, %v193
  %v195 = vmul.f32 %v194, %v194
  %v196 = vsel %vm182, %v195, 0.0
  %197 = vadd.xlane.f32.xlu0 %v196
  %v198 = vpop.xlane.xlu0 %197
  %v199 = vmul.f32 %v198, %v192
  %v200 = vld [vmem:[%s1 + $0x20] sm:$0xf]
  %v201 = vld [vmem:[%s1 + $0x28] sm:$0xf]
  %v202 = vadd.f32 %v199, 1e-05
  %v203 = vrsqrt.pop %v202
  %v204 = vmul.f32 %v203, %v202
  %v205 = vmul.f32 %v204, %v203
  %v206 = vmul.f32 0.5, %v205
  %v207 = vsub.f32 1.5, %v206
  %v208 = vmul.f32 %v203, %v207
  %vm209 = vweird.f32 %v202
  %vm210 = vweird.f32 %v203
  %vm211 = vmor %vm209, %vm210
  %v212 = vsel %vm211, %v203, %v208
  %v213 = vmul.f32 %v194, %v212
  %215 = vset.pattern.permute.xlu0 0
  %216 = vperm.xlu0 %215, %v200
  %v217 = vpop.permute.xlu0 %216
  %v219 = vmul.f32 %v213, %v217
  %221 = vset.pattern.permute.xlu0 0
  %222 = vperm.xlu0 %221, %v201
  %v223 = vpop.permute.xlu0 %222
  %v225 = vadd.f32 %v219, %v223
  %v226 = vld [vmem:[%s1 + $0x30] sm:$0x3]
  %vm227 = vcmask 15360
  %v229 = vsel %vm227, %v225, 0
  %vm231 = vcmask 1041408
  %v233 = vsel %vm231, %v226, 0
  %235 = vmatpush.msra.mxu0 0.0
  %236 = vmatpush.msra.mxu0 0.0
  %237 = vmatpush.msra.mxu0 0.0
  %238 = vmatpush.msra.mxu0 0.0
  %239 = vmatpush.msra.mxu0 0.0
  %240 = vmatpush.msra.mxu0 0.0
  %241 = vmatpush.msra.mxu0 0.0
  %242 = vmatpush.msra.mxu0 0.0
  %243 = vmatpush.msra.mxu0 0.0
  %244 = vmatpush.msra.mxu0 0.0
  %245 = vmatpush.msra.mxu0 0.0
  %246 = vmatpush.msra.mxu0 0.0
  %247 = vmatpush.msra.mxu0 0.0
  %248 = vmatpush.msra.mxu0 0.0
  %249 = vmatpush.msra.mxu0 0.0
  %250 = vmatpush.msra.mxu0 %v233
  %251 = vmatmul.f32.gmra.mxu0 %v229
  %v252 = vpop.f32.mrf.mxu0
  %v253 = vadd.f32 0.0, %v252
  %254 = vdwg.mxu0
  %v255 = vld [vmem:[%s1 + $0x40] sm:$0x1]
  %v256 = vsub.f32 %v253, %v255
  %v257 = vld [vmem:[%s1 + $0x41] sm:$0x1]
  %v259 = vrot.slane %v257, 7
  %v261 = vsub.f32 %v253, %v259
  %v262 = vld [vmem:[%s1 + $0x42] sm:$0x1]
  %v264 = vrot.slane %v262, 6
  %v266 = vsub.f32 %v253, %v264
  %v267 = vld [vmem:[%s1 + $0x43] sm:$0x1]
  %v269 = vrot.slane %v267, 5
  %v271 = vsub.f32 %v253, %v269
  %v272 = vld [vmem:[%s1 + $0x44] sm:$0x1]
  %v273 = vld [vmem:[%s1 + $0x45] sm:$0x1]
  %v274 = vmul.f32 %v256, %v256
  %v275 = vmul.f32 %v261, %v261
  %v277 = vrot.slane %v275, 1
  %v279 = vadd.f32 %v274, %v277
  %v280 = vmul.f32 %v266, %v266
  %v282 = vrot.slane %v280, 2
  %v284 = vadd.f32 %v279, %v282
  %v285 = vmul.f32 %v271, %v271
  %v287 = vrot.slane %v285, 3
  %v289 = vadd.f32 %v284, %v287
  %v290 = vrsqrt.pop %v289
  %v291 = vmul.f32 %v290, %v289
  %v292 = vmul.f32 %v291, %v290
  %v293 = vmul.f32 0.5, %v292
  %v294 = vsub.f32 1.5, %v293
  %v295 = vmul.f32 %v290, %v294
  %v296 = vmul.f32 %v289, %v295
  %vm297 = vcmp.eq.f32.partialorder %v289, inf
  %v298 = vsel %vm297, %v289, %v296
  %vm299 = vcmp.eq.f32.partialorder %v289, 0.0
  %v300 = vand.u32 %v289, 2147483648
  %v301 = vsel %vm299, %v300, %v298
  %v302 = vadd.f32 %v272, %v301
  %v303 = vrcp.pop %v302
  %v304 = vmul.f32 %v273, %v303
  %v305 = vmul.f32 %v304, %v256
  %v306 = vadd.f32 %v253, %v305
  %v308 = vrot.slane %v261, 1
  %v310 = vmul.f32 %v304, %v308
  %v312 = vrot.slane %v310, 7
  %v314 = vadd.f32 %v253, %v312
  %v316 = vrot.slane %v266, 2
  %v318 = vmul.f32 %v304, %v316
  %v320 = vrot.slane %v318, 6
  %v322 = vadd.f32 %v253, %v320
  %v324 = vrot.slane %v271, 3
  %v326 = vmul.f32 %v304, %v324
  %v328 = vrot.slane %v326, 5
  %v330 = vadd.f32 %v253, %v328
  %v331 = vadd.f32 %v304, 1.0
  %v332 = vmul.f32 %v304, %v303
  %v333 = vmul.f32 %v332, %v301
  %v334 = vsub.f32 %v331, %v333
  %v335 = vmul.f32 %v331, %v331
  %v336 = vmul.f32 %v335, %v331
  %v337 = vmul.f32 %v336, %v334
  %v338 = vlog2.pop %v337
  %v339 = vmul.f32 %v338, 0.6931472
  %v340 = vadd.f32 %v339, 0.0
  %v341 = vld [vmem:[%s1 + $0x48] sm:$0x1]
  %v342 = vsub.f32 %v306, %v341
  %v343 = vld [vmem:[%s1 + $0x49] sm:$0x1]
  %v345 = vrot.slane %v343, 7
  %v347 = vsub.f32 %v314, %v345
  %v348 = vld [vmem:[%s1 + $0x4a] sm:$0x1]
  %v350 = vrot.slane %v348, 6
  %v352 = vsub.f32 %v322, %v350
  %v353 = vld [vmem:[%s1 + $0x4b] sm:$0x1]
  %v355 = vrot.slane %v353, 5
  %v357 = vsub.f32 %v330, %v355
  %v358 = vld [vmem:[%s1 + $0x4c] sm:$0x1]
  %v359 = vld [vmem:[%s1 + $0x4d] sm:$0x1]
  %v360 = vmul.f32 %v342, %v342
  %v361 = vmul.f32 %v347, %v347
  %v363 = vrot.slane %v361, 1
  %v365 = vadd.f32 %v360, %v363
  %v366 = vmul.f32 %v352, %v352
  %v368 = vrot.slane %v366, 2
  %v370 = vadd.f32 %v365, %v368
  %v371 = vmul.f32 %v357, %v357
  %v373 = vrot.slane %v371, 3
  %v375 = vadd.f32 %v370, %v373
  %v376 = vrsqrt.pop %v375
  %v377 = vmul.f32 %v376, %v375
  %v378 = vmul.f32 %v377, %v376
  %v379 = vmul.f32 0.5, %v378
  %v380 = vsub.f32 1.5, %v379
  %v381 = vmul.f32 %v376, %v380
  %v382 = vmul.f32 %v375, %v381
  %vm383 = vcmp.eq.f32.partialorder %v375, inf
  %v384 = vsel %vm383, %v375, %v382
  %vm385 = vcmp.eq.f32.partialorder %v375, 0.0
  %v386 = vand.u32 %v375, 2147483648
  %v387 = vsel %vm385, %v386, %v384
  %v388 = vadd.f32 %v358, %v387
  %v389 = vrcp.pop %v388
  %v390 = vmul.f32 %v359, %v389
  %v391 = vmul.f32 %v390, %v342
  %v392 = vadd.f32 %v306, %v391
  %v394 = vrot.slane %v347, 1
  %v396 = vmul.f32 %v390, %v394
  %v398 = vrot.slane %v396, 7
  %v400 = vadd.f32 %v314, %v398
  %v402 = vrot.slane %v352, 2
  %v404 = vmul.f32 %v390, %v402
  %v406 = vrot.slane %v404, 6
  %v408 = vadd.f32 %v322, %v406
  %v410 = vrot.slane %v357, 3
  %v412 = vmul.f32 %v390, %v410
  %v414 = vrot.slane %v412, 5
  %v416 = vadd.f32 %v330, %v414
  %v417 = vadd.f32 %v390, 1.0
  %v418 = vmul.f32 %v390, %v389
  %v419 = vmul.f32 %v418, %v387
  %v420 = vsub.f32 %v417, %v419
  %v421 = vmul.f32 %v417, %v417
  %v422 = vmul.f32 %v421, %v417
  %v423 = vmul.f32 %v422, %v420
  %v424 = vlog2.pop %v423
  %v425 = vmul.f32 %v424, 0.6931472
  %v426 = vadd.f32 %v340, %v425
  %v427 = vld [vmem:[%s1 + $0x50] sm:$0x1]
  %v428 = vsub.f32 %v392, %v427
  %v429 = vld [vmem:[%s1 + $0x51] sm:$0x1]
  %v431 = vrot.slane %v429, 7
  %v433 = vsub.f32 %v400, %v431
  %v434 = vld [vmem:[%s1 + $0x52] sm:$0x1]
  %v436 = vrot.slane %v434, 6
  %v438 = vsub.f32 %v408, %v436
  %v439 = vld [vmem:[%s1 + $0x53] sm:$0x1]
  %v441 = vrot.slane %v439, 5
  %v443 = vsub.f32 %v416, %v441
  %v444 = vld [vmem:[%s1 + $0x54] sm:$0x1]
  %v445 = vld [vmem:[%s1 + $0x55] sm:$0x1]
  %v446 = vmul.f32 %v428, %v428
  %v447 = vmul.f32 %v433, %v433
  %v449 = vrot.slane %v447, 1
  %v451 = vadd.f32 %v446, %v449
  %v452 = vmul.f32 %v438, %v438
  %v454 = vrot.slane %v452, 2
  %v456 = vadd.f32 %v451, %v454
  %v457 = vmul.f32 %v443, %v443
  %v459 = vrot.slane %v457, 3
  %v461 = vadd.f32 %v456, %v459
  %v462 = vrsqrt.pop %v461
  %v463 = vmul.f32 %v462, %v461
  %v464 = vmul.f32 %v463, %v462
  %v465 = vmul.f32 0.5, %v464
  %v466 = vsub.f32 1.5, %v465
  %v467 = vmul.f32 %v462, %v466
  %v468 = vmul.f32 %v461, %v467
  %vm469 = vcmp.eq.f32.partialorder %v461, inf
  %v470 = vsel %vm469, %v461, %v468
  %vm471 = vcmp.eq.f32.partialorder %v461, 0.0
  %v472 = vand.u32 %v461, 2147483648
  %v473 = vsel %vm471, %v472, %v470
  %v474 = vadd.f32 %v444, %v473
  %v475 = vrcp.pop %v474
  %v476 = vmul.f32 %v445, %v475
  %v477 = vmul.f32 %v476, %v428
  %v478 = vadd.f32 %v392, %v477
  %v480 = vrot.slane %v433, 1
  %v482 = vmul.f32 %v476, %v480
  %v484 = vrot.slane %v482, 7
  %v486 = vadd.f32 %v400, %v484
  %v488 = vrot.slane %v438, 2
  %v490 = vmul.f32 %v476, %v488
  %v492 = vrot.slane %v490, 6
  %v494 = vadd.f32 %v408, %v492
  %v496 = vrot.slane %v443, 3
  %v498 = vmul.f32 %v476, %v496
  %v500 = vrot.slane %v498, 5
  %v502 = vadd.f32 %v416, %v500
  %v503 = vadd.f32 %v476, 1.0
  %v504 = vmul.f32 %v476, %v475
  %v505 = vmul.f32 %v504, %v473
  %v506 = vsub.f32 %v503, %v505
  %v507 = vmul.f32 %v503, %v503
  %v508 = vmul.f32 %v507, %v503
  %v509 = vmul.f32 %v508, %v506
  %v510 = vlog2.pop %v509
  %v511 = vmul.f32 %v510, 0.6931472
  %v512 = vadd.f32 %v426, %v511
  %v513 = vld [vmem:[%s1 + $0x58] sm:$0x1]
  %v514 = vsub.f32 %v478, %v513
  %v515 = vld [vmem:[%s1 + $0x59] sm:$0x1]
  %v517 = vrot.slane %v515, 7
  %v519 = vsub.f32 %v486, %v517
  %v520 = vld [vmem:[%s1 + $0x5a] sm:$0x1]
  %v522 = vrot.slane %v520, 6
  %v524 = vsub.f32 %v494, %v522
  %v525 = vld [vmem:[%s1 + $0x5b] sm:$0x1]
  %v527 = vrot.slane %v525, 5
  %v529 = vsub.f32 %v502, %v527
  %v530 = vld [vmem:[%s1 + $0x5c] sm:$0x1]
  %v531 = vld [vmem:[%s1 + $0x5d] sm:$0x1]
  %v532 = vmul.f32 %v514, %v514
  %v533 = vmul.f32 %v519, %v519
  %v535 = vrot.slane %v533, 1
  %v537 = vadd.f32 %v532, %v535
  %v538 = vmul.f32 %v524, %v524
  %v540 = vrot.slane %v538, 2
  %v542 = vadd.f32 %v537, %v540
  %v543 = vmul.f32 %v529, %v529
  %v545 = vrot.slane %v543, 3
  %v547 = vadd.f32 %v542, %v545
  %v548 = vrsqrt.pop %v547
  %v549 = vmul.f32 %v548, %v547
  %v550 = vmul.f32 %v549, %v548
  %v551 = vmul.f32 0.5, %v550
  %v552 = vsub.f32 1.5, %v551
  %v553 = vmul.f32 %v548, %v552
  %v554 = vmul.f32 %v547, %v553
  %vm555 = vcmp.eq.f32.partialorder %v547, inf
  %v556 = vsel %vm555, %v547, %v554
  %vm557 = vcmp.eq.f32.partialorder %v547, 0.0
  %v558 = vand.u32 %v547, 2147483648
  %v559 = vsel %vm557, %v558, %v556
  %v560 = vadd.f32 %v530, %v559
  %v561 = vrcp.pop %v560
  %v562 = vmul.f32 %v531, %v561
  %v563 = vmul.f32 %v562, %v514
  %v564 = vadd.f32 %v478, %v563
  %v566 = vrot.slane %v519, 1
  %v568 = vmul.f32 %v562, %v566
  %v570 = vrot.slane %v568, 7
  %v572 = vadd.f32 %v486, %v570
  %v574 = vrot.slane %v524, 2
  %v576 = vmul.f32 %v562, %v574
  %v578 = vrot.slane %v576, 6
  %v580 = vadd.f32 %v494, %v578
  %v582 = vrot.slane %v529, 3
  %v584 = vmul.f32 %v562, %v582
  %v586 = vrot.slane %v584, 5
  %v588 = vadd.f32 %v502, %v586
  %v589 = vadd.f32 %v562, 1.0
  %v590 = vmul.f32 %v562, %v561
  %v591 = vmul.f32 %v590, %v559
  %v592 = vsub.f32 %v589, %v591
  %v593 = vmul.f32 %v589, %v589
  %v594 = vmul.f32 %v593, %v589
  %v595 = vmul.f32 %v594, %v592
  %v596 = vlog2.pop %v595
  %v597 = vmul.f32 %v596, 0.6931472
  %v598 = vadd.f32 %v512, %v597
  %v599 = vld [vmem:[%s1 + $0x60] sm:$0x1]
  %v600 = vsub.f32 %v564, %v599
  %v601 = vld [vmem:[%s1 + $0x61] sm:$0x1]
  %v603 = vrot.slane %v601, 7
  %v605 = vsub.f32 %v572, %v603
  %v606 = vld [vmem:[%s1 + $0x62] sm:$0x1]
  %v608 = vrot.slane %v606, 6
  %v610 = vsub.f32 %v580, %v608
  %v611 = vld [vmem:[%s1 + $0x63] sm:$0x1]
  %v613 = vrot.slane %v611, 5
  %v615 = vsub.f32 %v588, %v613
  %v616 = vld [vmem:[%s1 + $0x64] sm:$0x1]
  %v617 = vld [vmem:[%s1 + $0x65] sm:$0x1]
  %v618 = vmul.f32 %v600, %v600
  %v619 = vmul.f32 %v605, %v605
  %v621 = vrot.slane %v619, 1
  %v623 = vadd.f32 %v618, %v621
  %v624 = vmul.f32 %v610, %v610
  %v626 = vrot.slane %v624, 2
  %v628 = vadd.f32 %v623, %v626
  %v629 = vmul.f32 %v615, %v615
  %v631 = vrot.slane %v629, 3
  %v633 = vadd.f32 %v628, %v631
  %v634 = vrsqrt.pop %v633
  %v635 = vmul.f32 %v634, %v633
  %v636 = vmul.f32 %v635, %v634
  %v637 = vmul.f32 0.5, %v636
  %v638 = vsub.f32 1.5, %v637
  %v639 = vmul.f32 %v634, %v638
  %v640 = vmul.f32 %v633, %v639
  %vm641 = vcmp.eq.f32.partialorder %v633, inf
  %v642 = vsel %vm641, %v633, %v640
  %vm643 = vcmp.eq.f32.partialorder %v633, 0.0
  %v644 = vand.u32 %v633, 2147483648
  %v645 = vsel %vm643, %v644, %v642
  %v646 = vadd.f32 %v616, %v645
  %v647 = vrcp.pop %v646
  %v648 = vmul.f32 %v617, %v647
  %v649 = vmul.f32 %v648, %v600
  %v650 = vadd.f32 %v564, %v649
  %v652 = vrot.slane %v605, 1
  %v654 = vmul.f32 %v648, %v652
  %v656 = vrot.slane %v654, 7
  %v658 = vadd.f32 %v572, %v656
  %v660 = vrot.slane %v610, 2
  %v662 = vmul.f32 %v648, %v660
  %v664 = vrot.slane %v662, 6
  %v666 = vadd.f32 %v580, %v664
  %v668 = vrot.slane %v615, 3
  %v670 = vmul.f32 %v648, %v668
  %v672 = vrot.slane %v670, 5
  %v674 = vadd.f32 %v588, %v672
  %v675 = vadd.f32 %v648, 1.0
  %v676 = vmul.f32 %v648, %v647
  %v677 = vmul.f32 %v676, %v645
  %v678 = vsub.f32 %v675, %v677
  %v679 = vmul.f32 %v675, %v675
  %v680 = vmul.f32 %v679, %v675
  %v681 = vmul.f32 %v680, %v678
  %v682 = vlog2.pop %v681
  %v683 = vmul.f32 %v682, 0.6931472
  %v684 = vadd.f32 %v598, %v683
  %v685 = vld [vmem:[%s1 + $0x68] sm:$0x1]
  %v686 = vsub.f32 %v650, %v685
  %v687 = vld [vmem:[%s1 + $0x69] sm:$0x1]
  %v689 = vrot.slane %v687, 7
  %v691 = vsub.f32 %v658, %v689
  %v692 = vld [vmem:[%s1 + $0x6a] sm:$0x1]
  %v694 = vrot.slane %v692, 6
  %v696 = vsub.f32 %v666, %v694
  %v697 = vld [vmem:[%s1 + $0x6b] sm:$0x1]
  %v699 = vrot.slane %v697, 5
  %v701 = vsub.f32 %v674, %v699
  %v702 = vld [vmem:[%s1 + $0x6c] sm:$0x1]
  %v703 = vld [vmem:[%s1 + $0x6d] sm:$0x1]
  %v704 = vmul.f32 %v686, %v686
  %v705 = vmul.f32 %v691, %v691
  %v707 = vrot.slane %v705, 1
  %v709 = vadd.f32 %v704, %v707
  %v710 = vmul.f32 %v696, %v696
  %v712 = vrot.slane %v710, 2
  %v714 = vadd.f32 %v709, %v712
  %v715 = vmul.f32 %v701, %v701
  %v717 = vrot.slane %v715, 3
  %v719 = vadd.f32 %v714, %v717
  %v720 = vrsqrt.pop %v719
  %v721 = vmul.f32 %v720, %v719
  %v722 = vmul.f32 %v721, %v720
  %v723 = vmul.f32 0.5, %v722
  %v724 = vsub.f32 1.5, %v723
  %v725 = vmul.f32 %v720, %v724
  %v726 = vmul.f32 %v719, %v725
  %vm727 = vcmp.eq.f32.partialorder %v719, inf
  %v728 = vsel %vm727, %v719, %v726
  %vm729 = vcmp.eq.f32.partialorder %v719, 0.0
  %v730 = vand.u32 %v719, 2147483648
  %v731 = vsel %vm729, %v730, %v728
  %v732 = vadd.f32 %v702, %v731
  %v733 = vrcp.pop %v732
  %v734 = vmul.f32 %v703, %v733
  %v735 = vmul.f32 %v734, %v686
  %v736 = vadd.f32 %v650, %v735
  %v738 = vrot.slane %v691, 1
  %v740 = vmul.f32 %v734, %v738
  %v742 = vrot.slane %v740, 7
  %v744 = vadd.f32 %v658, %v742
  %v746 = vrot.slane %v696, 2
  %v748 = vmul.f32 %v734, %v746
  %v750 = vrot.slane %v748, 6
  %v752 = vadd.f32 %v666, %v750
  %v754 = vrot.slane %v701, 3
  %v756 = vmul.f32 %v734, %v754
  %v758 = vrot.slane %v756, 5
  %v760 = vadd.f32 %v674, %v758
  %v761 = vadd.f32 %v734, 1.0
  %v762 = vmul.f32 %v734, %v733
  %v763 = vmul.f32 %v762, %v731
  %v764 = vsub.f32 %v761, %v763
  %v765 = vmul.f32 %v761, %v761
  %v766 = vmul.f32 %v765, %v761
  %v767 = vmul.f32 %v766, %v764
  %v768 = vlog2.pop %v767
  %v769 = vmul.f32 %v768, 0.6931472
  %v770 = vadd.f32 %v684, %v769
  %v771 = vld [vmem:[%s1 + $0x70] sm:$0x1]
  %v772 = vsub.f32 %v736, %v771
  %v773 = vld [vmem:[%s1 + $0x71] sm:$0x1]
  %v775 = vrot.slane %v773, 7
  %v777 = vsub.f32 %v744, %v775
  %v778 = vld [vmem:[%s1 + $0x72] sm:$0x1]
  %v780 = vrot.slane %v778, 6
  %v782 = vsub.f32 %v752, %v780
  %v783 = vld [vmem:[%s1 + $0x73] sm:$0x1]
  %v785 = vrot.slane %v783, 5
  %v787 = vsub.f32 %v760, %v785
  %v788 = vld [vmem:[%s1 + $0x74] sm:$0x1]
  %v789 = vld [vmem:[%s1 + $0x75] sm:$0x1]
  %v790 = vmul.f32 %v772, %v772
  %v791 = vmul.f32 %v777, %v777
  %v793 = vrot.slane %v791, 1
  %v795 = vadd.f32 %v790, %v793
  %v796 = vmul.f32 %v782, %v782
  %v798 = vrot.slane %v796, 2
  %v800 = vadd.f32 %v795, %v798
  %v801 = vmul.f32 %v787, %v787
  %v803 = vrot.slane %v801, 3
  %v805 = vadd.f32 %v800, %v803
  %v806 = vrsqrt.pop %v805
  %v807 = vmul.f32 %v806, %v805
  %v808 = vmul.f32 %v807, %v806
  %v809 = vmul.f32 0.5, %v808
  %v810 = vsub.f32 1.5, %v809
  %v811 = vmul.f32 %v806, %v810
  %v812 = vmul.f32 %v805, %v811
  %vm813 = vcmp.eq.f32.partialorder %v805, inf
  %v814 = vsel %vm813, %v805, %v812
  %vm815 = vcmp.eq.f32.partialorder %v805, 0.0
  %v816 = vand.u32 %v805, 2147483648
  %v817 = vsel %vm815, %v816, %v814
  %v818 = vadd.f32 %v788, %v817
  %v819 = vrcp.pop %v818
  %v820 = vmul.f32 %v789, %v819
  %v821 = vmul.f32 %v820, %v772
  %v822 = vadd.f32 %v736, %v821
  %v824 = vrot.slane %v777, 1
  %v826 = vmul.f32 %v820, %v824
  %v828 = vrot.slane %v826, 7
  %v830 = vadd.f32 %v744, %v828
  %v832 = vrot.slane %v782, 2
  %v834 = vmul.f32 %v820, %v832
  %v836 = vrot.slane %v834, 6
  %v838 = vadd.f32 %v752, %v836
  %v840 = vrot.slane %v787, 3
  %v842 = vmul.f32 %v820, %v840
  %v844 = vrot.slane %v842, 5
  %v846 = vadd.f32 %v760, %v844
  %v847 = vadd.f32 %v820, 1.0
  %v848 = vmul.f32 %v820, %v819
  %v849 = vmul.f32 %v848, %v817
  %v850 = vsub.f32 %v847, %v849
  %v851 = vmul.f32 %v847, %v847
  %v852 = vmul.f32 %v851, %v847
  %v853 = vmul.f32 %v852, %v850
  %v854 = vlog2.pop %v853
  %v855 = vmul.f32 %v854, 0.6931472
  %v856 = vadd.f32 %v770, %v855
  %v857 = vld [vmem:[%s1 + $0x78] sm:$0x1]
  %v858 = vsub.f32 %v822, %v857
  %v859 = vld [vmem:[%s1 + $0x79] sm:$0x1]
  %v861 = vrot.slane %v859, 7
  %v863 = vsub.f32 %v830, %v861
  %v864 = vld [vmem:[%s1 + $0x7a] sm:$0x1]
  %v866 = vrot.slane %v864, 6
  %v868 = vsub.f32 %v838, %v866
  %v869 = vld [vmem:[%s1 + $0x7b] sm:$0x1]
  %v871 = vrot.slane %v869, 5
  %v873 = vsub.f32 %v846, %v871
  %v874 = vld [vmem:[%s1 + $0x7c] sm:$0x1]
  %v875 = vld [vmem:[%s1 + $0x7d] sm:$0x1]
  %v876 = vmul.f32 %v858, %v858
  %v877 = vmul.f32 %v863, %v863
  %v879 = vrot.slane %v877, 1
  %v881 = vadd.f32 %v876, %v879
  %v882 = vmul.f32 %v868, %v868
  %v884 = vrot.slane %v882, 2
  %v886 = vadd.f32 %v881, %v884
  %v887 = vmul.f32 %v873, %v873
  %v889 = vrot.slane %v887, 3
  %v891 = vadd.f32 %v886, %v889
  %v892 = vrsqrt.pop %v891
  %v893 = vmul.f32 %v892, %v891
  %v894 = vmul.f32 %v893, %v892
  %v895 = vmul.f32 0.5, %v894
  %v896 = vsub.f32 1.5, %v895
  %v897 = vmul.f32 %v892, %v896
  %v898 = vmul.f32 %v891, %v897
  %vm899 = vcmp.eq.f32.partialorder %v891, inf
  %v900 = vsel %vm899, %v891, %v898
  %vm901 = vcmp.eq.f32.partialorder %v891, 0.0
  %v902 = vand.u32 %v891, 2147483648
  %v903 = vsel %vm901, %v902, %v900
  %v904 = vadd.f32 %v874, %v903
  %v905 = vrcp.pop %v904
  %v906 = vmul.f32 %v875, %v905
  %v907 = vmul.f32 %v906, %v858
  %v908 = vadd.f32 %v822, %v907
  %v910 = vrot.slane %v863, 1
  %v912 = vmul.f32 %v906, %v910
  %v914 = vrot.slane %v912, 7
  %v916 = vadd.f32 %v830, %v914
  %v918 = vrot.slane %v868, 2
  %v920 = vmul.f32 %v906, %v918
  %v922 = vrot.slane %v920, 6
  %v924 = vadd.f32 %v838, %v922
  %v926 = vrot.slane %v873, 3
  %v928 = vmul.f32 %v906, %v926
  %v930 = vrot.slane %v928, 5
  %v932 = vadd.f32 %v846, %v930
  %v933 = vadd.f32 %v906, 1.0
  %v934 = vmul.f32 %v906, %v905
  %v935 = vmul.f32 %v934, %v903
  %v936 = vsub.f32 %v933, %v935
  %v937 = vmul.f32 %v933, %v933
  %v938 = vmul.f32 %v937, %v933
  %v939 = vmul.f32 %v938, %v936
  %v940 = vlog2.pop %v939
  %v941 = vmul.f32 %v940, 0.6931472
  %v942 = vadd.f32 %v856, %v941
  %v943 = vmul.f32 %v908, %v908
  %v944 = vmul.f32 %v916, %v916
  %v946 = vrot.slane %v944, 1
  %v948 = vadd.f32 %v943, %v946
  %v949 = vmul.f32 %v924, %v924
  %v951 = vrot.slane %v949, 2
  %v953 = vadd.f32 %v948, %v951
  %v954 = vmul.f32 %v932, %v932
  %v956 = vrot.slane %v954, 3
  %v958 = vadd.f32 %v953, %v956
  %v959 = vmul.f32 %v958, -0.5
  %v960 = vsub.f32 %v959, 3.675754
  %v961 = vld [vmem:[%s1 + $0x38] sm:$0x1]
  %v962 = vadd.f32 %v960, %v942
  %v963 = vmul.f32 %v962, 1.442695
  %v964 = vpow.pop %v963
  %v965 = vmul.f32 %v961, %v964
  %v966 = vadd.f32 %v965, 1.0
  %967 = vst [vmem:[%s2] sm:$0x1] %v966
  // Predicated region
  $region10: #{post_covernet_forward.1} parent=0 // pred_check
    _
  $region11: #{post_covernet_forward.1} parent=0 // pred_check_branch
    %969 = sbr.rel (0) target = $region13
  $region12: #{post_covernet_forward.1} parent=0 // pred_region
    _
  $region13: #{post_covernet_forward.1} parent=0 // pred_fallthru
    _
  // Predicated region
  $region14: #{post_covernet_forward.1} parent=0 // pred_check
    _
  $region15: #{post_covernet_forward.1} parent=0 // pred_check_branch
    %971 = sbr.rel (0) target = $region17
  $region16: #{post_covernet_forward.1} parent=0 // pred_region
    _
  $region17: #{post_covernet_forward.1} parent=0 // pred_fallthru
    _

</llo_original>
